<compile_context>
chip_gen: v7x
topology: tpu7x:2x2x1
jax: 0.10.0
libtpu: 0.0.40
codegen_flags: <defaults>
</compile_context>

<pallas_src>
import jax
import jax.numpy as jnp
from jax.experimental import pallas as pl
from jax.experimental.pallas import tpu as pltpu

# Tap order shared by kernel and wrapper: (dy, dx) for the 3x3 window.
_TAPS = tuple((dy, dx) for dy in (-1, 0, 1) for dx in (-1, 0, 1))


def _make_kernel(img_w, hw, nb, c_out, has_downsample, compute_dtype):
    """Fused Bottleneck kernel for nb samples packed along lanes (L = nb*hw)."""
    lanes = nb * hw

    def kernel(x_ref, wcat_ref, w2_ref, m_ref, b_ref,
               sw1_ref, sb1_ref, sw2_ref, w3_ref, o_ref):
        f32 = jnp.float32
        x = x_ref[0].astype(f32)                                   # (Cin, L)
        b = b_ref[...]                                             # (C, 4)
        b1, b2, b34, seb2 = b[:, 0:1], b[:, 1:2], b[:, 2:3], b[:, 3:4]

        # conv1 (1x1) fused with the downsample shortcut: one matmul on the
        # shared x operand, static-sliced afterwards.
        y0 = jnp.dot(wcat_ref[...], x.astype(compute_dtype),
                     preferred_element_type=f32)                   # (Cp, L)
        if has_downsample:
            y, sc = y0[:c_out], y0[c_out:]
        else:
            y, sc = y0, x                                          # identity
        y = jnp.maximum(y + b1, 0.0)                               # (C, L)

        # conv2: grouped 3x3, stride 1, pad 1 as ONE wide-K matmul.  Each tap
        # is a lane-rolled + masked copy of y; taps stack along sublanes.
        taps = []
        for t, (dy, dx) in enumerate(_TAPS):
            off = dy * img_w + dx
            if off == 0:
                taps.append(y.astype(compute_dtype))               # mask == 1
            else:
                src = pltpu.roll(y, shift=(-off) % lanes, axis=1) * m_ref[t]
                taps.append(src.astype(compute_dtype))
        slab = jnp.concatenate(taps, axis=0)                       # (9C, L)
        y = jnp.dot(w2_ref[...], slab, preferred_element_type=f32)
        y = jnp.maximum(y + b2, 0.0)                               # (C, L)

        # Squeeze-Excitation.  Per-sample lane pooling (1/hw is folded into
        # the fc1 weight); tiny fc1/fc2 and all elementwise math stay f32.
        cols = [jnp.sum(y[:, k * hw:(k + 1) * hw], axis=1, keepdims=True)
                for k in range(nb)]
        pooled = cols[0] if nb == 1 else jnp.concatenate(cols, axis=1)  # (C,nb)
        h = jnp.dot(sw1_ref[...], pooled, preferred_element_type=f32)
        h = jnp.maximum(h + sb1_ref[...], 0.0)                     # (S, nb)
        se = jnp.dot(sw2_ref[...], h, preferred_element_type=f32) + seb2
        sig = jax.nn.sigmoid(se)                                   # (C, nb)
        segs = [y[:, k * hw:(k + 1) * hw] * sig[:, k:k + 1] for k in range(nb)]
        y = segs[0] if nb == 1 else jnp.concatenate(segs, axis=1)

        # conv3 (1x1) + folded BN.  Dropout (p = 0) is identity.
        y = jnp.dot(w3_ref[...], y.astype(compute_dtype),
                    preferred_element_type=f32)

        # Residual add + final ReLU (conv3 + downsample biases pre-summed).
        o_ref[0] = jnp.maximum(y + sc + b34, 0.0).astype(o_ref.dtype)

    return kernel


def _conv2_tap_weights(w2, bn2_scale):
    """Expand grouped 3x3 weights (C, cg, 3, 3) into 9 dense (C, C) matrices
    (block-diagonal over groups), with the BN scale folded in."""
    c_out, cg = w2.shape[0], w2.shape[1]
    assert c_out % cg == 0
    co = jnp.arange(c_out)
    ci = jnp.arange(c_out)
    g_of_co = co // cg
    in_group = (ci[None, :] // cg) == g_of_co[:, None]            # (C, C)
    local = jnp.clip(ci[None, :] - g_of_co[:, None] * cg, 0, cg - 1)
    taps = []
    for (dy, dx) in _TAPS:
        wt = w2[:, :, dy + 1, dx + 1]                             # (C, cg)
        dense = jnp.where(in_group, wt[co[:, None], local], 0.0)
        taps.append(dense * bn2_scale[:, None])
    return jnp.stack(taps, axis=0)                                # (9, C, C)


def _tap_masks(h, w):
    """(9, 1, H*W) float masks marking in-bounds source pixels per tap."""
    yy = jnp.arange(h)[:, None]
    xx = jnp.arange(w)[None, :]
    ms = []
    for (dy, dx) in _TAPS:
        m = ((yy + dy >= 0) & (yy + dy < h) & (xx + dx >= 0) & (xx + dx < w))
        ms.append(m.astype(jnp.float32).reshape(1, h * w))
    return jnp.stack(ms, axis=0)


def bottleneck_forward(x, p, *, group_width, stride=1, eps=1e-5,
                       compute_dtype=jnp.bfloat16, samples_per_step=None):
    """x: (N, Cin, H, W) f32.  p: dict of raw (PyTorch-layout) parameters."""
    if stride != 1:
        raise NotImplementedError(
            "TODO(synk): stride > 1 (conv2/downsample) not implemented in the "
            "Pallas kernel.")
    n, c_in, h, w = x.shape
    c_out = p["w1"].shape[0]
    s_dim = p["se_w1"].shape[0]
    hw = h * w
    f32 = jnp.float32

    # Samples packed per grid step: widen the lane axis while keeping >= 2
    # "parallel" grid blocks (both v7x TensorCores busy) whenever n >= 2.
    if samples_per_step is None:
        samples_per_step = n // 2 if (n >= 4 and n % 2 == 0) else 1
    nb = samples_per_step
    assert n % nb == 0, "batch must be divisible by samples_per_step"
    grid = n // nb
    lanes = nb * hw

    def fold(wgt, bn):
        gamma, beta, mean, var = bn
        s = gamma / jnp.sqrt(var + eps)
        return (wgt * s[:, None]).astype(f32), (beta - mean * s).astype(f32)

    w1f, b1f = fold(p["w1"], p["bn1"])
    w3f, b3f = fold(p["w3"], p["bn3"])
    has_downsample = p.get("wd") is not None
    if has_downsample:
        wdf, bdf = fold(p["wd"], p["bnd"])
        wcat = jnp.concatenate([w1f, wdf], axis=0)                # (2C, Cin)
    else:                      # identity shortcut (c_in == c_out, stride == 1)
        assert c_in == c_out
        bdf = jnp.zeros((c_out,), f32)
        wcat = w1f                                                # (C, Cin)

    g2, beta2, m2, v2 = p["bn2"]
    s2 = g2 / jnp.sqrt(v2 + eps)
    taps9 = _conv2_tap_weights(p["w2"].astype(f32), s2)           # (9, C, C)
    w2cat = jnp.transpose(taps9, (1, 0, 2)).reshape(c_out, 9 * c_out)
    b2f = (beta2 - m2 * s2).astype(f32)

    # conv3 and downsample biases only ever appear summed before the final ReLU.
    bias_stack = jnp.stack([b1f, b2f, b3f + bdf, p["se_b2"].astype(f32)],
                           axis=1)                                # (C, 4)
    masks = jnp.tile(_tap_masks(h, w), (1, 1, nb))                # (9, 1, L)
    sw1 = p["se_w1"].astype(f32) * (1.0 / hw)                     # 1/hw folded
    sb1 = p["se_b1"].astype(f32).reshape(s_dim, 1)
    sw2 = p["se_w2"].astype(f32)                                  # (C, S)

    # MXU operands in compute_dtype (bf16 halves weight VMEM, 2-4x MXU rate);
    # accumulation stays f32 via preferred_element_type.
    wcat = wcat.astype(compute_dtype)
    w2cat = w2cat.astype(compute_dtype)
    w3c = w3f.astype(compute_dtype)

    # Channels-major, lane-dense packing: each grid step sees one (C, nb*HW)
    # slab (nb samples side by side along lanes; stores are full-lane vst).
    xp = x.reshape(grid, nb, c_in, hw).transpose(0, 2, 1, 3).reshape(
        grid, c_in, lanes)

    kernel = _make_kernel(w, hw, nb, c_out, has_downsample, compute_dtype)

    def const_spec(shape, mode):
        zeros = (0,) * len(shape)
        kw = {} if mode is None else {"pipeline_mode": mode}
        return pl.BlockSpec(shape, lambda i, z=zeros: z, **kw)

    def run(mode):
        grid_spec = pltpu.PrefetchScalarGridSpec(
            num_scalar_prefetch=0,
            grid=(grid,),
            in_specs=[
                pl.BlockSpec((1, c_in, lanes), lambda i: (i, 0, 0)),   # x
                const_spec(wcat.shape, mode),        # conv1 [+ downsample]
                const_spec(w2cat.shape, mode),       # conv2 taps (C, 9C)
                const_spec(masks.shape, mode),       # tap masks
                const_spec(bias_stack.shape, mode),  # bias stack (C, 4)
                const_spec(sw1.shape, mode),         # SE fc1 (1/hw folded)
                const_spec(sb1.shape, mode),         # SE b1
                const_spec(sw2.shape, mode),         # SE fc2
                const_spec(w3c.shape, mode),         # conv3
            ],
            out_specs=pl.BlockSpec((1, c_out, lanes), lambda i: (i, 0, 0)),
        )
        return pl.pallas_call(
            kernel,
            out_shape=jax.ShapeDtypeStruct((grid, c_out, lanes), x.dtype),
            grid_spec=grid_spec,
            compiler_params=pltpu.CompilerParams(
                dimension_semantics=("parallel",),
                vmem_limit_bytes=32 * 1024 * 1024),
        )(xp, wcat, w2cat, masks, bias_stack, sw1, sb1, sw2, w3c)

    try:
        # Constant-index weight/mask blocks never change across grid steps:
        # single-buffer them so VMEM is not doubled for no benefit.
        out = run(pl.Buffered(1))
    except Exception:
        # TODO(synk): this JAX build rejected pipeline_mode=pl.Buffered(1);
        # falling back to default double-buffering of the constant blocks.
        out = run(None)

    out = out.reshape(grid, c_out, nb, hw).transpose(0, 2, 1, 3)
    return out.reshape(n, c_out, h, w)


def _reference(x, p, *, groups, stride=1, eps=1e-5):
    """Pure-JAX reference of Bottleneck.forward (inference-mode BN)."""
    hp = jax.lax.Precision.HIGHEST

    def bn(z, params):
        gamma, beta, mean, var = params
        inv = gamma / jnp.sqrt(var + eps)
        return (z - mean[None, :, None, None]) * inv[None, :, None, None] \
            + beta[None, :, None, None]

    def conv(z, wgt, strd=1, padding="VALID", fgc=1):
        return jax.lax.conv_general_dilated(
            z, wgt, window_strides=(strd, strd), padding=padding,
            dimension_numbers=("NCHW", "OIHW", "NCHW"),
            feature_group_count=fgc, precision=hp)

    y = jax.nn.relu(bn(conv(x, p["w1"][:, :, None, None]), p["bn1"]))
    y = jax.nn.relu(bn(conv(y, p["w2"], strd=stride,
                            padding=((1, 1), (1, 1)), fgc=groups), p["bn2"]))
    se = jnp.mean(y, axis=(2, 3), keepdims=True)
    se = jnp.einsum("sc,ncij->nsij", p["se_w1"], se, precision=hp) \
        + p["se_b1"][None, :, None, None]
    se = jax.nn.relu(se)
    se = jnp.einsum("cs,nsij->ncij", p["se_w2"], se, precision=hp) \
        + p["se_b2"][None, :, None, None]
    y = y * jax.nn.sigmoid(se)
    y = bn(conv(y, p["w3"][:, :, None, None]), p["bn3"])
    if p.get("wd") is not None:
        shortcut = bn(conv(x, p["wd"][:, :, None, None], strd=stride), p["bnd"])
    else:
        shortcut = x
    return jax.nn.relu(y + shortcut)


if __name__ == "__main__":
    # Bottleneck(in_c=8, out_c=16, stride=1, group_width=4, se_ratio=0.25)
    in_c, out_c = 8, 16
    stride = 1
    group_width = 4
    groups = out_c // group_width
    se_ratio = 0.25
    squeeze_c = int(in_c * se_ratio)          # SqueezeExcitation(in_c, out_c, ...)
    N, H, W = 4, 16, 8                        # HW = 128; 2 samples/step -> L=256

    key = jax.random.PRNGKey(0)
    ks = list(jax.random.split(key, 16))

    def nrm(k, shape, s=0.2):
        return s * jax.random.normal(k, shape, dtype=jnp.float32)

    def bn_params(k):
        k1, k2, k3, k4 = jax.random.split(k, 4)
        gamma = 1.0 + 0.1 * jax.random.normal(k1, (out_c,), dtype=jnp.float32)
        beta = 0.1 * jax.random.normal(k2, (out_c,), dtype=jnp.float32)
        mean = 0.1 * jax.random.normal(k3, (out_c,), dtype=jnp.float32)
        var = 1.0 + 0.2 * jax.random.uniform(k4, (out_c,), dtype=jnp.float32)
        return (gamma, beta, mean, var)

    x = jax.random.normal(ks[0], (N, in_c, H, W), dtype=jnp.float32)

    params = dict(
        w1=nrm(ks[1], (out_c, in_c)), bn1=bn_params(ks[2]),
        w2=nrm(ks[3], (out_c, group_width, 3, 3)), bn2=bn_params(ks[4]),
        se_w1=nrm(ks[5], (squeeze_c, out_c)), se_b1=nrm(ks[6], (squeeze_c,)),
        se_w2=nrm(ks[7], (out_c, squeeze_c)), se_b2=nrm(ks[8], (out_c,)),
        w3=nrm(ks[9], (out_c, out_c)), bn3=bn_params(ks[10]),
        wd=nrm(ks[11], (out_c, in_c)), bnd=bn_params(ks[12]),
    )

    ref = _reference(x, params, groups=groups, stride=stride)

    # 1) f32 compute path: tight tolerance vs the f32 reference.
    out_f32 = bottleneck_forward(x, params, group_width=group_width,
                                 stride=stride, compute_dtype=jnp.float32,
                                 samples_per_step=2)
    out_f32 = jax.block_until_ready(out_f32)
    assert out_f32.shape == (N, out_c, H, W)
    assert jnp.allclose(out_f32, ref, atol=2e-3, rtol=2e-3), "f32 mismatch"

    # 2) bf16 MXU-operand path (f32 accumulation): re-validated tolerance.
    out_bf16 = bottleneck_forward(x, params, group_width=group_width,
                                  stride=stride, compute_dtype=jnp.bfloat16,
                                  samples_per_step=2)
    out_bf16 = jax.block_until_ready(out_bf16)
    assert out_bf16.shape == (N, out_c, H, W)
    assert jnp.allclose(out_bf16, ref, atol=8e-2, rtol=8e-2), "bf16 mismatch"

    print("KERNEL_OK")
</pallas_src>

<mosaic_0001>
module attributes {stable_mosaic.version = 11 : i64} {
  func.func @kernel(%arg0: i32, %arg1: memref<1x8x256xf32, #tpu.memory_space<vmem>>, %arg2: memref<32x8xf32, #tpu.memory_space<vmem>>, %arg3: memref<16x144xf32, #tpu.memory_space<vmem>>, %arg4: memref<9x1x256xf32, #tpu.memory_space<vmem>>, %arg5: memref<16x4xf32, #tpu.memory_space<vmem>>, %arg6: memref<2x16xf32, #tpu.memory_space<vmem>>, %arg7: memref<2x1xf32, #tpu.memory_space<vmem>>, %arg8: memref<16x2xf32, #tpu.memory_space<vmem>>, %arg9: memref<16x16xf32, #tpu.memory_space<vmem>>, %arg10: memref<1x16x256xf32, #tpu.memory_space<vmem>>) attributes {dimension_semantics = [#tpu.dimension_semantics<parallel>], iteration_bounds = array<i64: 2>, scalar_prefetch = 0 : i64, scratch_operands = 0 : i64, tpu.core_type = #tpu.core_type<tc>, window_params = [{transform_indices = @transform_0, window_bounds = array<i64: 1, 8, 256>}, {pipeline_mode = #tpu.pipeline_mode<synchronous>, transform_indices = @transform_1, window_bounds = array<i64: 32, 8>}, {pipeline_mode = #tpu.pipeline_mode<synchronous>, transform_indices = @transform_2, window_bounds = array<i64: 16, 144>}, {pipeline_mode = #tpu.pipeline_mode<synchronous>, transform_indices = @transform_3, window_bounds = array<i64: 9, 1, 256>}, {pipeline_mode = #tpu.pipeline_mode<synchronous>, transform_indices = @transform_4, window_bounds = array<i64: 16, 4>}, {pipeline_mode = #tpu.pipeline_mode<synchronous>, transform_indices = @transform_5, window_bounds = array<i64: 2, 16>}, {pipeline_mode = #tpu.pipeline_mode<synchronous>, transform_indices = @transform_6, window_bounds = array<i64: 2, 1>}, {pipeline_mode = #tpu.pipeline_mode<synchronous>, transform_indices = @transform_7, window_bounds = array<i64: 16, 2>}, {pipeline_mode = #tpu.pipeline_mode<synchronous>, transform_indices = @transform_8, window_bounds = array<i64: 16, 16>}, {transform_indices = @transform_9, window_bounds = array<i64: 1, 16, 256>}]} {
    %c0 = arith.constant 0 : index
    %c0_0 = arith.constant 0 : index
    %c0_1 = arith.constant 0 : index
    %0 = vector.load %arg1[%c0, %c0_0, %c0_1] : memref<1x8x256xf32, #tpu.memory_space<vmem>>, vector<1x8x256xf32>
    %1 = vector.shape_cast %0 : vector<1x8x256xf32> to vector<8x256xf32>
    %c0_2 = arith.constant 0 : index
    %c0_3 = arith.constant 0 : index
    %2 = vector.load %arg5[%c0_2, %c0_3] : memref<16x4xf32, #tpu.memory_space<vmem>>, vector<16x4xf32>
    %3 = vector.extract_strided_slice %2 {offsets = [0, 0], sizes = [16, 1], strides = [1, 1]} : vector<16x4xf32> to vector<16x1xf32>
    %4 = vector.extract_strided_slice %2 {offsets = [0, 1], sizes = [16, 1], strides = [1, 1]} : vector<16x4xf32> to vector<16x1xf32>
    %5 = vector.extract_strided_slice %2 {offsets = [0, 2], sizes = [16, 1], strides = [1, 1]} : vector<16x4xf32> to vector<16x1xf32>
    %6 = vector.extract_strided_slice %2 {offsets = [0, 3], sizes = [16, 1], strides = [1, 1]} : vector<16x4xf32> to vector<16x1xf32>
    %c0_4 = arith.constant 0 : index
    %c0_5 = arith.constant 0 : index
    %7 = vector.load %arg2[%c0_4, %c0_5] : memref<32x8xf32, #tpu.memory_space<vmem>>, vector<32x8xf32>
    %cst = arith.constant dense<0.000000e+00> : vector<32x256xf32>
    %8 = tpu.matmul %7, %1, %cst {dimension_numbers = #tpu.dot_dimension_numbers<[1], [0], [0], [1], [0, 0, 1, 1], [], []>} : vector<32x8xf32>, vector<8x256xf32>, vector<32x256xf32> -> vector<32x256xf32>
    %9 = vector.extract_strided_slice %8 {offsets = [0, 0], sizes = [16, 256], strides = [1, 1]} : vector<32x256xf32> to vector<16x256xf32>
    %10 = vector.extract_strided_slice %8 {offsets = [16, 0], sizes = [16, 256], strides = [1, 1]} : vector<32x256xf32> to vector<16x256xf32>
    %11 = vector.broadcast %3 : vector<16x1xf32> to vector<16x256xf32>
    %12 = arith.addf %9, %11 : vector<16x256xf32>
    %cst_6 = arith.constant 0.000000e+00 : f32
    %13 = vector.broadcast %cst_6 : f32 to vector<16x256xf32>
    %14 = arith.maximumf %12, %13 : vector<16x256xf32>
    %c9_i32 = arith.constant 9 : i32
    %15 = tpu.dynamic_rotate %14 by %c9_i32 dim 1 : vector<16x256xf32>, i32 -> vector<16x256xf32>
    %c0_7 = arith.constant 0 : index
    %c0_8 = arith.constant 0 : index
    %c0_9 = arith.constant 0 : index
    %16 = vector.load %arg4[%c0_7, %c0_8, %c0_9] : memref<9x1x256xf32, #tpu.memory_space<vmem>>, vector<1x1x256xf32>
    %17 = vector.shape_cast %16 : vector<1x1x256xf32> to vector<1x256xf32>
    %18 = vector.broadcast %17 : vector<1x256xf32> to vector<16x256xf32>
    %19 = arith.mulf %15, %18 : vector<16x256xf32>
    %c8_i32 = arith.constant 8 : i32
    %20 = tpu.dynamic_rotate %14 by %c8_i32 dim 1 : vector<16x256xf32>, i32 -> vector<16x256xf32>
    %c1 = arith.constant 1 : index
    %c0_10 = arith.constant 0 : index
    %c0_11 = arith.constant 0 : index
    %21 = vector.load %arg4[%c1, %c0_10, %c0_11] : memref<9x1x256xf32, #tpu.memory_space<vmem>>, vector<1x1x256xf32>
    %22 = vector.shape_cast %21 : vector<1x1x256xf32> to vector<1x256xf32>
    %23 = vector.broadcast %22 : vector<1x256xf32> to vector<16x256xf32>
    %24 = arith.mulf %20, %23 : vector<16x256xf32>
    %c7_i32 = arith.constant 7 : i32
    %25 = tpu.dynamic_rotate %14 by %c7_i32 dim 1 : vector<16x256xf32>, i32 -> vector<16x256xf32>
    %c2 = arith.constant 2 : index
    %c0_12 = arith.constant 0 : index
    %c0_13 = arith.constant 0 : index
    %26 = vector.load %arg4[%c2, %c0_12, %c0_13] : memref<9x1x256xf32, #tpu.memory_space<vmem>>, vector<1x1x256xf32>
    %27 = vector.shape_cast %26 : vector<1x1x256xf32> to vector<1x256xf32>
    %28 = vector.broadcast %27 : vector<1x256xf32> to vector<16x256xf32>
    %29 = arith.mulf %25, %28 : vector<16x256xf32>
    %c1_i32 = arith.constant 1 : i32
    %30 = tpu.dynamic_rotate %14 by %c1_i32 dim 1 : vector<16x256xf32>, i32 -> vector<16x256xf32>
    %c3 = arith.constant 3 : index
    %c0_14 = arith.constant 0 : index
    %c0_15 = arith.constant 0 : index
    %31 = vector.load %arg4[%c3, %c0_14, %c0_15] : memref<9x1x256xf32, #tpu.memory_space<vmem>>, vector<1x1x256xf32>
    %32 = vector.shape_cast %31 : vector<1x1x256xf32> to vector<1x256xf32>
    %33 = vector.broadcast %32 : vector<1x256xf32> to vector<16x256xf32>
    %34 = arith.mulf %30, %33 : vector<16x256xf32>
    %c255_i32 = arith.constant 255 : i32
    %35 = tpu.dynamic_rotate %14 by %c255_i32 dim 1 : vector<16x256xf32>, i32 -> vector<16x256xf32>
    %c5 = arith.constant 5 : index
    %c0_16 = arith.constant 0 : index
    %c0_17 = arith.constant 0 : index
    %36 = vector.load %arg4[%c5, %c0_16, %c0_17] : memref<9x1x256xf32, #tpu.memory_space<vmem>>, vector<1x1x256xf32>
    %37 = vector.shape_cast %36 : vector<1x1x256xf32> to vector<1x256xf32>
    %38 = vector.broadcast %37 : vector<1x256xf32> to vector<16x256xf32>
    %39 = arith.mulf %35, %38 : vector<16x256xf32>
    %c249_i32 = arith.constant 249 : i32
    %40 = tpu.dynamic_rotate %14 by %c249_i32 dim 1 : vector<16x256xf32>, i32 -> vector<16x256xf32>
    %c6 = arith.constant 6 : index
    %c0_18 = arith.constant 0 : index
    %c0_19 = arith.constant 0 : index
    %41 = vector.load %arg4[%c6, %c0_18, %c0_19] : memref<9x1x256xf32, #tpu.memory_space<vmem>>, vector<1x1x256xf32>
    %42 = vector.shape_cast %41 : vector<1x1x256xf32> to vector<1x256xf32>
    %43 = vector.broadcast %42 : vector<1x256xf32> to vector<16x256xf32>
    %44 = arith.mulf %40, %43 : vector<16x256xf32>
    %c248_i32 = arith.constant 248 : i32
    %45 = tpu.dynamic_rotate %14 by %c248_i32 dim 1 : vector<16x256xf32>, i32 -> vector<16x256xf32>
    %c7 = arith.constant 7 : index
    %c0_20 = arith.constant 0 : index
    %c0_21 = arith.constant 0 : index
    %46 = vector.load %arg4[%c7, %c0_20, %c0_21] : memref<9x1x256xf32, #tpu.memory_space<vmem>>, vector<1x1x256xf32>
    %47 = vector.shape_cast %46 : vector<1x1x256xf32> to vector<1x256xf32>
    %48 = vector.broadcast %47 : vector<1x256xf32> to vector<16x256xf32>
    %49 = arith.mulf %45, %48 : vector<16x256xf32>
    %c247_i32 = arith.constant 247 : i32
    %50 = tpu.dynamic_rotate %14 by %c247_i32 dim 1 : vector<16x256xf32>, i32 -> vector<16x256xf32>
    %c8 = arith.constant 8 : index
    %c0_22 = arith.constant 0 : index
    %c0_23 = arith.constant 0 : index
    %51 = vector.load %arg4[%c8, %c0_22, %c0_23] : memref<9x1x256xf32, #tpu.memory_space<vmem>>, vector<1x1x256xf32>
    %52 = vector.shape_cast %51 : vector<1x1x256xf32> to vector<1x256xf32>
    %53 = vector.broadcast %52 : vector<1x256xf32> to vector<16x256xf32>
    %54 = arith.mulf %50, %53 : vector<16x256xf32>
    %55 = tpu.concatenate %19, %24, %29, %34, %14, %39, %44, %49, %54 in 0 : vector<16x256xf32>, vector<16x256xf32>, vector<16x256xf32>, vector<16x256xf32>, vector<16x256xf32>, vector<16x256xf32>, vector<16x256xf32>, vector<16x256xf32>, vector<16x256xf32> -> vector<144x256xf32>
    %c0_24 = arith.constant 0 : index
    %c0_25 = arith.constant 0 : index
    %56 = vector.load %arg3[%c0_24, %c0_25] : memref<16x144xf32, #tpu.memory_space<vmem>>, vector<16x144xf32>
    %cst_26 = arith.constant dense<0.000000e+00> : vector<16x256xf32>
    %57 = tpu.matmul %56, %55, %cst_26 {dimension_numbers = #tpu.dot_dimension_numbers<[1], [0], [0], [1], [0, 0, 1, 1], [], []>} : vector<16x144xf32>, vector<144x256xf32>, vector<16x256xf32> -> vector<16x256xf32>
    %58 = vector.broadcast %4 : vector<16x1xf32> to vector<16x256xf32>
    %59 = arith.addf %57, %58 : vector<16x256xf32>
    %cst_27 = arith.constant 0.000000e+00 : f32
    %60 = vector.broadcast %cst_27 : f32 to vector<16x256xf32>
    %61 = arith.maximumf %59, %60 : vector<16x256xf32>
    %62 = vector.extract_strided_slice %61 {offsets = [0, 0], sizes = [16, 128], strides = [1, 1]} : vector<16x256xf32> to vector<16x128xf32>
    %cst_28 = arith.constant dense<0.000000e+00> : vector<16xf32>
    %63 = vector.multi_reduction <add>, %62, %cst_28 [1] : vector<16x128xf32> to vector<16xf32>
    %64 = vector.shape_cast %63 : vector<16xf32> to vector<16x1xf32>
    %65 = vector.extract_strided_slice %61 {offsets = [0, 128], sizes = [16, 128], strides = [1, 1]} : vector<16x256xf32> to vector<16x128xf32>
    %cst_29 = arith.constant dense<0.000000e+00> : vector<16xf32>
    %66 = vector.multi_reduction <add>, %65, %cst_29 [1] : vector<16x128xf32> to vector<16xf32>
    %67 = vector.shape_cast %66 : vector<16xf32> to vector<16x1xf32>
    %68 = tpu.concatenate %64, %67 in 1 : vector<16x1xf32>, vector<16x1xf32> -> vector<16x2xf32>
    %c0_30 = arith.constant 0 : index
    %c0_31 = arith.constant 0 : index
    %69 = vector.load %arg6[%c0_30, %c0_31] : memref<2x16xf32, #tpu.memory_space<vmem>>, vector<2x16xf32>
    %cst_32 = arith.constant dense<0.000000e+00> : vector<2x2xf32>
    %70 = tpu.matmul %69, %68, %cst_32 {dimension_numbers = #tpu.dot_dimension_numbers<[1], [0], [0], [1], [0, 0, 1, 1], [], []>} : vector<2x16xf32>, vector<16x2xf32>, vector<2x2xf32> -> vector<2x2xf32>
    %c0_33 = arith.constant 0 : index
    %c0_34 = arith.constant 0 : index
    %71 = vector.load %arg7[%c0_33, %c0_34] : memref<2x1xf32, #tpu.memory_space<vmem>>, vector<2x1xf32>
    %72 = vector.broadcast %71 : vector<2x1xf32> to vector<2x2xf32>
    %73 = arith.addf %70, %72 : vector<2x2xf32>
    %cst_35 = arith.constant 0.000000e+00 : f32
    %74 = vector.broadcast %cst_35 : f32 to vector<2x2xf32>
    %75 = arith.maximumf %73, %74 : vector<2x2xf32>
    %c0_36 = arith.constant 0 : index
    %c0_37 = arith.constant 0 : index
    %76 = vector.load %arg8[%c0_36, %c0_37] : memref<16x2xf32, #tpu.memory_space<vmem>>, vector<16x2xf32>
    %cst_38 = arith.constant dense<0.000000e+00> : vector<16x2xf32>
    %77 = tpu.matmul %76, %75, %cst_38 {dimension_numbers = #tpu.dot_dimension_numbers<[1], [0], [0], [1], [0, 0, 1, 1], [], []>} : vector<16x2xf32>, vector<2x2xf32>, vector<16x2xf32> -> vector<16x2xf32>
    %78 = vector.broadcast %6 : vector<16x1xf32> to vector<16x2xf32>
    %79 = arith.addf %77, %78 : vector<16x2xf32>
    %80 = arith.negf %79 : vector<16x2xf32>
    %81 = math.exp %80 : vector<16x2xf32>
    %cst_39 = arith.constant 1.000000e+00 : f32
    %82 = vector.broadcast %cst_39 : f32 to vector<16x2xf32>
    %83 = arith.addf %82, %81 : vector<16x2xf32>
    %84 = arith.divf %82, %83 : vector<16x2xf32>
    %85 = vector.extract_strided_slice %61 {offsets = [0, 0], sizes = [16, 128], strides = [1, 1]} : vector<16x256xf32> to vector<16x128xf32>
    %86 = vector.extract_strided_slice %84 {offsets = [0, 0], sizes = [16, 1], strides = [1, 1]} : vector<16x2xf32> to vector<16x1xf32>
    %87 = vector.broadcast %86 : vector<16x1xf32> to vector<16x128xf32>
    %88 = arith.mulf %85, %87 : vector<16x128xf32>
    %89 = vector.extract_strided_slice %61 {offsets = [0, 128], sizes = [16, 128], strides = [1, 1]} : vector<16x256xf32> to vector<16x128xf32>
    %90 = vector.extract_strided_slice %84 {offsets = [0, 1], sizes = [16, 1], strides = [1, 1]} : vector<16x2xf32> to vector<16x1xf32>
    %91 = vector.broadcast %90 : vector<16x1xf32> to vector<16x128xf32>
    %92 = arith.mulf %89, %91 : vector<16x128xf32>
    %93 = tpu.concatenate %88, %92 in 1 : vector<16x128xf32>, vector<16x128xf32> -> vector<16x256xf32>
    %c0_40 = arith.constant 0 : index
    %c0_41 = arith.constant 0 : index
    %94 = vector.load %arg9[%c0_40, %c0_41] : memref<16x16xf32, #tpu.memory_space<vmem>>, vector<16x16xf32>
    %cst_42 = arith.constant dense<0.000000e+00> : vector<16x256xf32>
    %95 = tpu.matmul %94, %93, %cst_42 {dimension_numbers = #tpu.dot_dimension_numbers<[1], [0], [0], [1], [0, 0, 1, 1], [], []>} : vector<16x16xf32>, vector<16x256xf32>, vector<16x256xf32> -> vector<16x256xf32>
    %96 = arith.addf %95, %10 : vector<16x256xf32>
    %97 = vector.broadcast %5 : vector<16x1xf32> to vector<16x256xf32>
    %98 = arith.addf %96, %97 : vector<16x256xf32>
    %cst_43 = arith.constant 0.000000e+00 : f32
    %99 = vector.broadcast %cst_43 : f32 to vector<16x256xf32>
    %100 = arith.maximumf %98, %99 : vector<16x256xf32>
    %c0_44 = arith.constant 0 : index
    %c0_45 = arith.constant 0 : index
    %c0_46 = arith.constant 0 : index
    %101 = vector.load %arg10[%c0_44, %c0_45, %c0_46] : memref<1x16x256xf32, #tpu.memory_space<vmem>>, vector<1x16x256xf32>
    %102 = vector.shape_cast %101 : vector<1x16x256xf32> to vector<16x256xf32>
    %103 = vector.shape_cast %100 : vector<16x256xf32> to vector<1x16x256xf32>
    tpu.vector_store %arg10[%c0_44, %c0_45, %c0_46], %103 {strides = array<i32>} : memref<1x16x256xf32, #tpu.memory_space<vmem>>, vector<1x16x256xf32>,
    return
  }
  func.func @transform_0(%arg0: i32) -> (i32, i32, i32) {
    %c0_i32 = arith.constant 0 : i32
    %c0_i32_0 = arith.constant 0 : i32
    %c0_i32_1 = arith.constant 0 : i32
    return %arg0, %c0_i32, %c0_i32_0 : i32, i32, i32
  }
  func.func @transform_1(%arg0: i32) -> (i32, i32) {
    %c0_i32 = arith.constant 0 : i32
    %c0_i32_0 = arith.constant 0 : i32
    %c0_i32_1 = arith.constant 0 : i32
    return %c0_i32, %c0_i32_0 : i32, i32
  }
  func.func @transform_2(%arg0: i32) -> (i32, i32) {
    %c0_i32 = arith.constant 0 : i32
    %c0_i32_0 = arith.constant 0 : i32
    %c0_i32_1 = arith.constant 0 : i32
    return %c0_i32, %c0_i32_0 : i32, i32
  }
  func.func @transform_3(%arg0: i32) -> (i32, i32, i32) {
    %c0_i32 = arith.constant 0 : i32
    %c0_i32_0 = arith.constant 0 : i32
    %c0_i32_1 = arith.constant 0 : i32
    %c0_i32_2 = arith.constant 0 : i32
    return %c0_i32, %c0_i32_0, %c0_i32_1 : i32, i32, i32
  }
  func.func @transform_4(%arg0: i32) -> (i32, i32) {
    %c0_i32 = arith.constant 0 : i32
    %c0_i32_0 = arith.constant 0 : i32
    %c0_i32_1 = arith.constant 0 : i32
    return %c0_i32, %c0_i32_0 : i32, i32
  }
  func.func @transform_5(%arg0: i32) -> (i32, i32) {
    %c0_i32 = arith.constant 0 : i32
    %c0_i32_0 = arith.constant 0 : i32
    %c0_i32_1 = arith.constant 0 : i32
    return %c0_i32, %c0_i32_0 : i32, i32
  }
  func.func @transform_6(%arg0: i32) -> (i32, i32) {
    %c0_i32 = arith.constant 0 : i32
    %c0_i32_0 = arith.constant 0 : i32
    %c0_i32_1 = arith.constant 0 : i32
    return %c0_i32, %c0_i32_0 : i32, i32
  }
  func.func @transform_7(%arg0: i32) -> (i32, i32) {
    %c0_i32 = arith.constant 0 : i32
    %c0_i32_0 = arith.constant 0 : i32
    %c0_i32_1 = arith.constant 0 : i32
    return %c0_i32, %c0_i32_0 : i32, i32
  }
  func.func @transform_8(%arg0: i32) -> (i32, i32) {
    %c0_i32 = arith.constant 0 : i32
    %c0_i32_0 = arith.constant 0 : i32
    %c0_i32_1 = arith.constant 0 : i32
    return %c0_i32, %c0_i32_0 : i32, i32
  }
  func.func @transform_9(%arg0: i32) -> (i32, i32, i32) {
    %c0_i32 = arith.constant 0 : i32
    %c0_i32_0 = arith.constant 0 : i32
    %c0_i32_1 = arith.constant 0 : i32
    return %arg0, %c0_i32, %c0_i32_0 : i32, i32, i32
  }
}

module attributes {stable_mosaic.version = 11 : i64} {
  func.func @kernel(%arg0: i32, %arg1: memref<1x8x256xf32, #tpu.memory_space<vmem>>, %arg2: memref<32x8xf32, #tpu.memory_space<vmem>>, %arg3: memref<16x144xf32, #tpu.memory_space<vmem>>, %arg4: memref<9x1x256xf32, #tpu.memory_space<vmem>>, %arg5: memref<16x4xf32, #tpu.memory_space<vmem>>, %arg6: memref<2x16xf32, #tpu.memory_space<vmem>>, %arg7: memref<2x1xf32, #tpu.memory_space<vmem>>, %arg8: memref<16x2xf32, #tpu.memory_space<vmem>>, %arg9: memref<16x16xf32, #tpu.memory_space<vmem>>, %arg10: memref<1x16x256xf32, #tpu.memory_space<vmem>>) attributes {dimension_semantics = [#tpu.dimension_semantics<parallel>], iteration_bounds = array<i64: 2>, scalar_prefetch = 0 : i64, scratch_operands = 0 : i64, tpu.core_type = #tpu.core_type<tc>, window_params = [{transform_indices = @transform_0, window_bounds = array<i64: 1, 8, 256>}, {pipeline_mode = #tpu.pipeline_mode<synchronous>, transform_indices = @transform_1, window_bounds = array<i64: 32, 8>}, {pipeline_mode = #tpu.pipeline_mode<synchronous>, transform_indices = @transform_2, window_bounds = array<i64: 16, 144>}, {pipeline_mode = #tpu.pipeline_mode<synchronous>, transform_indices = @transform_3, window_bounds = array<i64: 9, 1, 256>}, {pipeline_mode = #tpu.pipeline_mode<synchronous>, transform_indices = @transform_4, window_bounds = array<i64: 16, 4>}, {pipeline_mode = #tpu.pipeline_mode<synchronous>, transform_indices = @transform_5, window_bounds = array<i64: 2, 16>}, {pipeline_mode = #tpu.pipeline_mode<synchronous>, transform_indices = @transform_6, window_bounds = array<i64: 2, 1>}, {pipeline_mode = #tpu.pipeline_mode<synchronous>, transform_indices = @transform_7, window_bounds = array<i64: 16, 2>}, {pipeline_mode = #tpu.pipeline_mode<synchronous>, transform_indices = @transform_8, window_bounds = array<i64: 16, 16>}, {transform_indices = @transform_9, window_bounds = array<i64: 1, 16, 256>}]} {
    %c0 = arith.constant 0 : index
    %c0_0 = arith.constant 0 : index
    %c0_1 = arith.constant 0 : index
    %0 = vector.load %arg1[%c0, %c0_0, %c0_1] : memref<1x8x256xf32, #tpu.memory_space<vmem>>, vector<1x8x256xf32>
    %1 = vector.shape_cast %0 : vector<1x8x256xf32> to vector<8x256xf32>
    %c0_2 = arith.constant 0 : index
    %c0_3 = arith.constant 0 : index
    %2 = vector.load %arg5[%c0_2, %c0_3] : memref<16x4xf32, #tpu.memory_space<vmem>>, vector<16x4xf32>
    %3 = vector.extract_strided_slice %2 {offsets = [0, 0], sizes = [16, 1], strides = [1, 1]} : vector<16x4xf32> to vector<16x1xf32>
    %4 = vector.extract_strided_slice %2 {offsets = [0, 1], sizes = [16, 1], strides = [1, 1]} : vector<16x4xf32> to vector<16x1xf32>
    %5 = vector.extract_strided_slice %2 {offsets = [0, 2], sizes = [16, 1], strides = [1, 1]} : vector<16x4xf32> to vector<16x1xf32>
    %6 = vector.extract_strided_slice %2 {offsets = [0, 3], sizes = [16, 1], strides = [1, 1]} : vector<16x4xf32> to vector<16x1xf32>
    %c0_4 = arith.constant 0 : index
    %c0_5 = arith.constant 0 : index
    %7 = vector.load %arg2[%c0_4, %c0_5] : memref<32x8xf32, #tpu.memory_space<vmem>>, vector<32x8xf32>
    %cst = arith.constant dense<0.000000e+00> : vector<32x256xf32>
    %8 = tpu.matmul %7, %1, %cst {dimension_numbers = #tpu.dot_dimension_numbers<[1], [0], [0], [1], [0, 0, 1, 1], [], []>} : vector<32x8xf32>, vector<8x256xf32>, vector<32x256xf32> -> vector<32x256xf32>
    %9 = vector.extract_strided_slice %8 {offsets = [0, 0], sizes = [16, 256], strides = [1, 1]} : vector<32x256xf32> to vector<16x256xf32>
    %10 = vector.extract_strided_slice %8 {offsets = [16, 0], sizes = [16, 256], strides = [1, 1]} : vector<32x256xf32> to vector<16x256xf32>
    %11 = vector.broadcast %3 : vector<16x1xf32> to vector<16x256xf32>
    %12 = arith.addf %9, %11 : vector<16x256xf32>
    %cst_6 = arith.constant 0.000000e+00 : f32
    %13 = vector.broadcast %cst_6 : f32 to vector<16x256xf32>
    %14 = arith.maximumf %12, %13 : vector<16x256xf32>
    %c9_i32 = arith.constant 9 : i32
    %15 = tpu.dynamic_rotate %14 by %c9_i32 dim 1 : vector<16x256xf32>, i32 -> vector<16x256xf32>
    %c0_7 = arith.constant 0 : index
    %c0_8 = arith.constant 0 : index
    %c0_9 = arith.constant 0 : index
    %16 = vector.load %arg4[%c0_7, %c0_8, %c0_9] : memref<9x1x256xf32, #tpu.memory_space<vmem>>, vector<1x1x256xf32>
    %17 = vector.shape_cast %16 : vector<1x1x256xf32> to vector<1x256xf32>
    %18 = vector.broadcast %17 : vector<1x256xf32> to vector<16x256xf32>
    %19 = arith.mulf %15, %18 : vector<16x256xf32>
    %c8_i32 = arith.constant 8 : i32
    %20 = tpu.dynamic_rotate %14 by %c8_i32 dim 1 : vector<16x256xf32>, i32 -> vector<16x256xf32>
    %c1 = arith.constant 1 : index
    %c0_10 = arith.constant 0 : index
    %c0_11 = arith.constant 0 : index
    %21 = vector.load %arg4[%c1, %c0_10, %c0_11] : memref<9x1x256xf32, #tpu.memory_space<vmem>>, vector<1x1x256xf32>
    %22 = vector.shape_cast %21 : vector<1x1x256xf32> to vector<1x256xf32>
    %23 = vector.broadcast %22 : vector<1x256xf32> to vector<16x256xf32>
    %24 = arith.mulf %20, %23 : vector<16x256xf32>
    %c7_i32 = arith.constant 7 : i32
    %25 = tpu.dynamic_rotate %14 by %c7_i32 dim 1 : vector<16x256xf32>, i32 -> vector<16x256xf32>
    %c2 = arith.constant 2 : index
    %c0_12 = arith.constant 0 : index
    %c0_13 = arith.constant 0 : index
    %26 = vector.load %arg4[%c2, %c0_12, %c0_13] : memref<9x1x256xf32, #tpu.memory_space<vmem>>, vector<1x1x256xf32>
    %27 = vector.shape_cast %26 : vector<1x1x256xf32> to vector<1x256xf32>
    %28 = vector.broadcast %27 : vector<1x256xf32> to vector<16x256xf32>
    %29 = arith.mulf %25, %28 : vector<16x256xf32>
    %c1_i32 = arith.constant 1 : i32
    %30 = tpu.dynamic_rotate %14 by %c1_i32 dim 1 : vector<16x256xf32>, i32 -> vector<16x256xf32>
    %c3 = arith.constant 3 : index
    %c0_14 = arith.constant 0 : index
    %c0_15 = arith.constant 0 : index
    %31 = vector.load %arg4[%c3, %c0_14, %c0_15] : memref<9x1x256xf32, #tpu.memory_space<vmem>>, vector<1x1x256xf32>
    %32 = vector.shape_cast %31 : vector<1x1x256xf32> to vector<1x256xf32>
    %33 = vector.broadcast %32 : vector<1x256xf32> to vector<16x256xf32>
    %34 = arith.mulf %30, %33 : vector<16x256xf32>
    %c255_i32 = arith.constant 255 : i32
    %35 = tpu.dynamic_rotate %14 by %c255_i32 dim 1 : vector<16x256xf32>, i32 -> vector<16x256xf32>
    %c5 = arith.constant 5 : index
    %c0_16 = arith.constant 0 : index
    %c0_17 = arith.constant 0 : index
    %36 = vector.load %arg4[%c5, %c0_16, %c0_17] : memref<9x1x256xf32, #tpu.memory_space<vmem>>, vector<1x1x256xf32>
    %37 = vector.shape_cast %36 : vector<1x1x256xf32> to vector<1x256xf32>
    %38 = vector.broadcast %37 : vector<1x256xf32> to vector<16x256xf32>
    %39 = arith.mulf %35, %38 : vector<16x256xf32>
    %c249_i32 = arith.constant 249 : i32
    %40 = tpu.dynamic_rotate %14 by %c249_i32 dim 1 : vector<16x256xf32>, i32 -> vector<16x256xf32>
    %c6 = arith.constant 6 : index
    %c0_18 = arith.constant 0 : index
    %c0_19 = arith.constant 0 : index
    %41 = vector.load %arg4[%c6, %c0_18, %c0_19] : memref<9x1x256xf32, #tpu.memory_space<vmem>>, vector<1x1x256xf32>
    %42 = vector.shape_cast %41 : vector<1x1x256xf32> to vector<1x256xf32>
    %43 = vector.broadcast %42 : vector<1x256xf32> to vector<16x256xf32>
    %44 = arith.mulf %40, %43 : vector<16x256xf32>
    %c248_i32 = arith.constant 248 : i32
    %45 = tpu.dynamic_rotate %14 by %c248_i32 dim 1 : vector<16x256xf32>, i32 -> vector<16x256xf32>
    %c7 = arith.constant 7 : index
    %c0_20 = arith.constant 0 : index
    %c0_21 = arith.constant 0 : index
    %46 = vector.load %arg4[%c7, %c0_20, %c0_21] : memref<9x1x256xf32, #tpu.memory_space<vmem>>, vector<1x1x256xf32>
    %47 = vector.shape_cast %46 : vector<1x1x256xf32> to vector<1x256xf32>
    %48 = vector.broadcast %47 : vector<1x256xf32> to vector<16x256xf32>
    %49 = arith.mulf %45, %48 : vector<16x256xf32>
    %c247_i32 = arith.constant 247 : i32
    %50 = tpu.dynamic_rotate %14 by %c247_i32 dim 1 : vector<16x256xf32>, i32 -> vector<16x256xf32>
    %c8 = arith.constant 8 : index
    %c0_22 = arith.constant 0 : index
    %c0_23 = arith.constant 0 : index
    %51 = vector.load %arg4[%c8, %c0_22, %c0_23] : memref<9x1x256xf32, #tpu.memory_space<vmem>>, vector<1x1x256xf32>
    %52 = vector.shape_cast %51 : vector<1x1x256xf32> to vector<1x256xf32>
    %53 = vector.broadcast %52 : vector<1x256xf32> to vector<16x256xf32>
    %54 = arith.mulf %50, %53 : vector<16x256xf32>
    %55 = tpu.concatenate %19, %24, %29, %34, %14, %39, %44, %49, %54 in 0 : vector<16x256xf32>, vector<16x256xf32>, vector<16x256xf32>, vector<16x256xf32>, vector<16x256xf32>, vector<16x256xf32>, vector<16x256xf32>, vector<16x256xf32>, vector<16x256xf32> -> vector<144x256xf32>
    %c0_24 = arith.constant 0 : index
    %c0_25 = arith.constant 0 : index
    %56 = vector.load %arg3[%c0_24, %c0_25] : memref<16x144xf32, #tpu.memory_space<vmem>>, vector<16x144xf32>
    %cst_26 = arith.constant dense<0.000000e+00> : vector<16x256xf32>
    %57 = tpu.matmul %56, %55, %cst_26 {dimension_numbers = #tpu.dot_dimension_numbers<[1], [0], [0], [1], [0, 0, 1, 1], [], []>} : vector<16x144xf32>, vector<144x256xf32>, vector<16x256xf32> -> vector<16x256xf32>
    %58 = vector.broadcast %4 : vector<16x1xf32> to vector<16x256xf32>
    %59 = arith.addf %57, %58 : vector<16x256xf32>
    %cst_27 = arith.constant 0.000000e+00 : f32
    %60 = vector.broadcast %cst_27 : f32 to vector<16x256xf32>
    %61 = arith.maximumf %59, %60 : vector<16x256xf32>
    %62 = vector.extract_strided_slice %61 {offsets = [0, 0], sizes = [16, 128], strides = [1, 1]} : vector<16x256xf32> to vector<16x128xf32>
    %cst_28 = arith.constant dense<0.000000e+00> : vector<16xf32>
    %63 = vector.multi_reduction <add>, %62, %cst_28 [1] : vector<16x128xf32> to vector<16xf32>
    %64 = vector.shape_cast %63 : vector<16xf32> to vector<16x1xf32>
    %65 = vector.extract_strided_slice %61 {offsets = [0, 128], sizes = [16, 128], strides = [1, 1]} : vector<16x256xf32> to vector<16x128xf32>
    %cst_29 = arith.constant dense<0.000000e+00> : vector<16xf32>
    %66 = vector.multi_reduction <add>, %65, %cst_29 [1] : vector<16x128xf32> to vector<16xf32>
    %67 = vector.shape_cast %66 : vector<16xf32> to vector<16x1xf32>
    %68 = tpu.concatenate %64, %67 in 1 : vector<16x1xf32>, vector<16x1xf32> -> vector<16x2xf32>
    %c0_30 = arith.constant 0 : index
    %c0_31 = arith.constant 0 : index
    %69 = vector.load %arg6[%c0_30, %c0_31] : memref<2x16xf32, #tpu.memory_space<vmem>>, vector<2x16xf32>
    %cst_32 = arith.constant dense<0.000000e+00> : vector<2x2xf32>
    %70 = tpu.matmul %69, %68, %cst_32 {dimension_numbers = #tpu.dot_dimension_numbers<[1], [0], [0], [1], [0, 0, 1, 1], [], []>} : vector<2x16xf32>, vector<16x2xf32>, vector<2x2xf32> -> vector<2x2xf32>
    %c0_33 = arith.constant 0 : index
    %c0_34 = arith.constant 0 : index
    %71 = vector.load %arg7[%c0_33, %c0_34] : memref<2x1xf32, #tpu.memory_space<vmem>>, vector<2x1xf32>
    %72 = vector.broadcast %71 : vector<2x1xf32> to vector<2x2xf32>
    %73 = arith.addf %70, %72 : vector<2x2xf32>
    %cst_35 = arith.constant 0.000000e+00 : f32
    %74 = vector.broadcast %cst_35 : f32 to vector<2x2xf32>
    %75 = arith.maximumf %73, %74 : vector<2x2xf32>
    %c0_36 = arith.constant 0 : index
    %c0_37 = arith.constant 0 : index
    %76 = vector.load %arg8[%c0_36, %c0_37] : memref<16x2xf32, #tpu.memory_space<vmem>>, vector<16x2xf32>
    %cst_38 = arith.constant dense<0.000000e+00> : vector<16x2xf32>
    %77 = tpu.matmul %76, %75, %cst_38 {dimension_numbers = #tpu.dot_dimension_numbers<[1], [0], [0], [1], [0, 0, 1, 1], [], []>} : vector<16x2xf32>, vector<2x2xf32>, vector<16x2xf32> -> vector<16x2xf32>
    %78 = vector.broadcast %6 : vector<16x1xf32> to vector<16x2xf32>
    %79 = arith.addf %77, %78 : vector<16x2xf32>
    %80 = arith.negf %79 : vector<16x2xf32>
    %81 = math.exp %80 : vector<16x2xf32>
    %cst_39 = arith.constant 1.000000e+00 : f32
    %82 = vector.broadcast %cst_39 : f32 to vector<16x2xf32>
    %83 = arith.addf %82, %81 : vector<16x2xf32>
    %84 = arith.divf %82, %83 : vector<16x2xf32>
    %85 = vector.extract_strided_slice %61 {offsets = [0, 0], sizes = [16, 128], strides = [1, 1]} : vector<16x256xf32> to vector<16x128xf32>
    %86 = vector.extract_strided_slice %84 {offsets = [0, 0], sizes = [16, 1], strides = [1, 1]} : vector<16x2xf32> to vector<16x1xf32>
    %87 = vector.broadcast %86 : vector<16x1xf32> to vector<16x128xf32>
    %88 = arith.mulf %85, %87 : vector<16x128xf32>
    %89 = vector.extract_strided_slice %61 {offsets = [0, 128], sizes = [16, 128], strides = [1, 1]} : vector<16x256xf32> to vector<16x128xf32>
    %90 = vector.extract_strided_slice %84 {offsets = [0, 1], sizes = [16, 1], strides = [1, 1]} : vector<16x2xf32> to vector<16x1xf32>
    %91 = vector.broadcast %90 : vector<16x1xf32> to vector<16x128xf32>
    %92 = arith.mulf %89, %91 : vector<16x128xf32>
    %93 = tpu.concatenate %88, %92 in 1 : vector<16x128xf32>, vector<16x128xf32> -> vector<16x256xf32>
    %c0_40 = arith.constant 0 : index
    %c0_41 = arith.constant 0 : index
    %94 = vector.load %arg9[%c0_40, %c0_41] : memref<16x16xf32, #tpu.memory_space<vmem>>, vector<16x16xf32>
    %cst_42 = arith.constant dense<0.000000e+00> : vector<16x256xf32>
    %95 = tpu.matmul %94, %93, %cst_42 {dimension_numbers = #tpu.dot_dimension_numbers<[1], [0], [0], [1], [0, 0, 1, 1], [], []>} : vector<16x16xf32>, vector<16x256xf32>, vector<16x256xf32> -> vector<16x256xf32>
    %96 = arith.addf %95, %10 : vector<16x256xf32>
    %97 = vector.broadcast %5 : vector<16x1xf32> to vector<16x256xf32>
    %98 = arith.addf %96, %97 : vector<16x256xf32>
    %cst_43 = arith.constant 0.000000e+00 : f32
    %99 = vector.broadcast %cst_43 : f32 to vector<16x256xf32>
    %100 = arith.maximumf %98, %99 : vector<16x256xf32>
    %c0_44 = arith.constant 0 : index
    %c0_45 = arith.constant 0 : index
    %c0_46 = arith.constant 0 : index
    %101 = vector.load %arg10[%c0_44, %c0_45, %c0_46] : memref<1x16x256xf32, #tpu.memory_space<vmem>>, vector<1x16x256xf32>
    %102 = vector.shape_cast %101 : vector<1x16x256xf32> to vector<16x256xf32>
    %103 = vector.shape_cast %100 : vector<16x256xf32> to vector<1x16x256xf32>
    tpu.vector_store %arg10[%c0_44, %c0_45, %c0_46], %103 {strides = array<i32>} : memref<1x16x256xf32, #tpu.memory_space<vmem>>, vector<1x16x256xf32>,
    return
  }
  func.func @transform_0(%arg0: i32) -> (i32, i32, i32) {
    %c0_i32 = arith.constant 0 : i32
    %c0_i32_0 = arith.constant 0 : i32
    %c0_i32_1 = arith.constant 0 : i32
    return %arg0, %c0_i32, %c0_i32_0 : i32, i32, i32
  }
  func.func @transform_1(%arg0: i32) -> (i32, i32) {
    %c0_i32 = arith.constant 0 : i32
    %c0_i32_0 = arith.constant 0 : i32
    %c0_i32_1 = arith.constant 0 : i32
    return %c0_i32, %c0_i32_0 : i32, i32
  }
  func.func @transform_2(%arg0: i32) -> (i32, i32) {
    %c0_i32 = arith.constant 0 : i32
    %c0_i32_0 = arith.constant 0 : i32
    %c0_i32_1 = arith.constant 0 : i32
    return %c0_i32, %c0_i32_0 : i32, i32
  }
  func.func @transform_3(%arg0: i32) -> (i32, i32, i32) {
    %c0_i32 = arith.constant 0 : i32
    %c0_i32_0 = arith.constant 0 : i32
    %c0_i32_1 = arith.constant 0 : i32
    %c0_i32_2 = arith.constant 0 : i32
    return %c0_i32, %c0_i32_0, %c0_i32_1 : i32, i32, i32
  }
  func.func @transform_4(%arg0: i32) -> (i32, i32) {
    %c0_i32 = arith.constant 0 : i32
    %c0_i32_0 = arith.constant 0 : i32
    %c0_i32_1 = arith.constant 0 : i32
    return %c0_i32, %c0_i32_0 : i32, i32
  }
  func.func @transform_5(%arg0: i32) -> (i32, i32) {
    %c0_i32 = arith.constant 0 : i32
    %c0_i32_0 = arith.constant 0 : i32
    %c0_i32_1 = arith.constant 0 : i32
    return %c0_i32, %c0_i32_0 : i32, i32
  }
  func.func @transform_6(%arg0: i32) -> (i32, i32) {
    %c0_i32 = arith.constant 0 : i32
    %c0_i32_0 = arith.constant 0 : i32
    %c0_i32_1 = arith.constant 0 : i32
    return %c0_i32, %c0_i32_0 : i32, i32
  }
  func.func @transform_7(%arg0: i32) -> (i32, i32) {
    %c0_i32 = arith.constant 0 : i32
    %c0_i32_0 = arith.constant 0 : i32
    %c0_i32_1 = arith.constant 0 : i32
    return %c0_i32, %c0_i32_0 : i32, i32
  }
  func.func @transform_8(%arg0: i32) -> (i32, i32) {
    %c0_i32 = arith.constant 0 : i32
    %c0_i32_0 = arith.constant 0 : i32
    %c0_i32_1 = arith.constant 0 : i32
    return %c0_i32, %c0_i32_0 : i32, i32
  }
  func.func @transform_9(%arg0: i32) -> (i32, i32, i32) {
    %c0_i32 = arith.constant 0 : i32
    %c0_i32_0 = arith.constant 0 : i32
    %c0_i32_1 = arith.constant 0 : i32
    return %arg0, %c0_i32, %c0_i32_0 : i32, i32, i32
  }
}

</mosaic_0001>

<llo_original>
// kernel: tpu_custom_call.1
$region0: #{tpu_custom_call.1}
  #allocation0 [shape = 'u32[]', space=smem, size = 0x4, offset = 0x4, fixed_abs, tag = 'smem constant byte address 0x4 - core index']
  #allocation1 [shape = 'u32[144,128]{1,0:T(1,128)}', space=vmem, size = 0x12000, scoped, tag = 'internal scratch']
  %s0 = inlined_call_operand.vmem [shape: f32[2,8,256], index: 0, kind: input, shape index: {}]
  %s1 = inlined_call_operand.vmem [shape: f32[32,8], index: 1, kind: input, shape index: {}]
  %s2 = inlined_call_operand.vmem [shape: f32[16,144], index: 2, kind: input, shape index: {}]
  %s3 = inlined_call_operand.vmem [shape: f32[9,1,256], index: 3, kind: input, shape index: {}]
  %s4 = inlined_call_operand.vmem [shape: f32[16,4], index: 4, kind: input, shape index: {}]
  %s5 = inlined_call_operand.vmem [shape: f32[2,16], index: 5, kind: input, shape index: {}]
  %s6 = inlined_call_operand.vmem [shape: f32[2,1], index: 6, kind: input, shape index: {}]
  %s7 = inlined_call_operand.vmem [shape: f32[16,2], index: 7, kind: input, shape index: {}]
  %s8 = inlined_call_operand.vmem [shape: f32[16,16], index: 8, kind: input, shape index: {}]
  %s9 = inlined_call_operand.hbm [shape: f32[2,16,256], index: 9, kind: output, shape index: {}]
  %s10 = sld [smem:[#allocation0]]
  $region69: #{tpu_custom_call.1} parent=0
    _
  %s12 = ssub.s32 1, %s10
  %s13 = scalar_select 0, %s12, %s10
  $region1: #{tpu_custom_call.1} parent=0
    #allocation2 [shape = 'u8[32768]{0}', space=vmem, size = 0x8000, scoped, tag = 'output window, operand 0']
    #allocation3 [shape = 's32[2]{0}', space=sflag, size = 0x8, scoped, tag = 'scoped memory for tpu_custom_call.1']
    %14 = vsyncpa [#allocation3], 0
    %s15 = scalar_lea.sflag [#allocation3], 1
    %16 = vsyncpa %s15, 0
    loop: start=0, step=1, limit=4
    $region2: #{tpu_custom_call.1} parent=1 // loop_pre_header
      _
    $region3: #{tpu_custom_call.1} parent=1 // loop_header
      %s18 = sphi 0, %s22
      %p19 = scmp.ge.s32.totalorder %s18, 4
      %s28 = sphi 0, %s30
      %s31 = sphi 0, %s28
      %s32 = sphi 0, %s31
      %s48 = sphi 0, %s32
      %s52 = sphi 0, %s52
      %s54 = sphi 0, %s52
      %s55 = sphi 0, %s54
      %s69 = sphi 0, %s55
      %s73 = sphi 0, %s73
      %s75 = sphi 0, %s73
      %s76 = sphi 0, %s75
      %s90 = sphi 0, %s76
      %s94 = sphi 0, %s94
      %s96 = sphi 0, %s94
      %s97 = sphi 0, %s96
      %s111 = sphi 0, %s97
      %s115 = sphi 0, %s115
      %s117 = sphi 0, %s115
      %s118 = sphi 0, %s117
      %s132 = sphi 0, %s118
      %s136 = sphi 0, %s136
      %s138 = sphi 0, %s136
      %s139 = sphi 0, %s138
      %s153 = sphi 0, %s139
      %s157 = sphi 0, %s157
      %s159 = sphi 0, %s157
      %s160 = sphi 0, %s159
      %s174 = sphi 0, %s160
      %s178 = sphi 0, %s178
      %s180 = sphi 0, %s178
      %s181 = sphi 0, %s180
      %s195 = sphi 0, %s181
      %s199 = sphi 0, %s199
      %s201 = sphi 0, %s199
      %s202 = sphi 0, %s201
      %s216 = sphi 0, %s202
      %s222 = sphi 0, %s224
      %s225 = sphi 0, %s222
      %s226 = sphi 0, %s225
      %s242 = sphi 0, %s226
    $region4: #{tpu_custom_call.1} parent=1 // loop_header_branch
      %21 = sbr.rel (%p19) target = $region8
    $region5: #{tpu_custom_call.1} parent=1 // loop_body
      %s23 = ssub.s32 %s18, 1
      %s24 = ssub.s32 %s18, 2
      %s25 = sadd.s32 %s18, 1
      %s26 = ssub.s32 %s18, %s25
      %p27 = scmp.eq.s32.totalorder %s26, 0
      %s29 = sadd.s32 %s28, 1
      %s30 = scalar_select %p27, %s28, %s29
      %p33 = pneg %p27
      %p34 = scmp.eq.s32.totalorder %s18, 1
      %p35 = por %p33, %p34
      %p36 = scmp.ne.s32.totalorder %s28, %s31
      %p37 = scmp.eq.s32.totalorder %s18, 0
      %p38 = por %p36, %p37
      %p39 = scmp.ne.s32.totalorder %s28, %s31
      %p40 = scmp.eq.s32.totalorder %s23, 1
      %p41 = por %p39, %p40
      %p42 = scmp.ne.s32.totalorder %s31, %s32
      %p43 = scmp.eq.s32.totalorder %s23, 0
      %p44 = por %p42, %p43
      %p45 = scmp.ne.s32.totalorder %s31, %s32
      %p46 = scmp.eq.s32.totalorder %s24, 1
      %p47 = por %p45, %p46
      %p49 = scmp.ne.s32.totalorder %s32, %s48
      %p50 = scmp.eq.s32.totalorder %s24, 0
      %p51 = por %p49, %p50
      %s53 = sadd.s32 %s52, 1
      %p56 = scmp.eq.s32.totalorder %s18, 1
      %p57 = scmp.ne.s32.totalorder %s52, %s54
      %p58 = scmp.eq.s32.totalorder %s18, 0
      %p59 = por %p57, %p58
      %p60 = scmp.ne.s32.totalorder %s52, %s54
      %p61 = scmp.eq.s32.totalorder %s23, 1
      %p62 = por %p60, %p61
      %p63 = scmp.ne.s32.totalorder %s54, %s55
      %p64 = scmp.eq.s32.totalorder %s23, 0
      %p65 = por %p63, %p64
      %p66 = scmp.ne.s32.totalorder %s54, %s55
      %p67 = scmp.eq.s32.totalorder %s24, 1
      %p68 = por %p66, %p67
      %p70 = scmp.ne.s32.totalorder %s55, %s69
      %p71 = scmp.eq.s32.totalorder %s24, 0
      %p72 = por %p70, %p71
      %s74 = sadd.s32 %s73, 1
      %p77 = scmp.eq.s32.totalorder %s18, 1
      %p78 = scmp.ne.s32.totalorder %s73, %s75
      %p79 = scmp.eq.s32.totalorder %s18, 0
      %p80 = por %p78, %p79
      %p81 = scmp.ne.s32.totalorder %s73, %s75
      %p82 = scmp.eq.s32.totalorder %s23, 1
      %p83 = por %p81, %p82
      %p84 = scmp.ne.s32.totalorder %s75, %s76
      %p85 = scmp.eq.s32.totalorder %s23, 0
      %p86 = por %p84, %p85
      %p87 = scmp.ne.s32.totalorder %s75, %s76
      %p88 = scmp.eq.s32.totalorder %s24, 1
      %p89 = por %p87, %p88
      %p91 = scmp.ne.s32.totalorder %s76, %s90
      %p92 = scmp.eq.s32.totalorder %s24, 0
      %p93 = por %p91, %p92
      %s95 = sadd.s32 %s94, 1
      %p98 = scmp.eq.s32.totalorder %s18, 1
      %p99 = scmp.ne.s32.totalorder %s94, %s96
      %p100 = scmp.eq.s32.totalorder %s18, 0
      %p101 = por %p99, %p100
      %p102 = scmp.ne.s32.totalorder %s94, %s96
      %p103 = scmp.eq.s32.totalorder %s23, 1
      %p104 = por %p102, %p103
      %p105 = scmp.ne.s32.totalorder %s96, %s97
      %p106 = scmp.eq.s32.totalorder %s23, 0
      %p107 = por %p105, %p106
      %p108 = scmp.ne.s32.totalorder %s96, %s97
      %p109 = scmp.eq.s32.totalorder %s24, 1
      %p110 = por %p108, %p109
      %p112 = scmp.ne.s32.totalorder %s97, %s111
      %p113 = scmp.eq.s32.totalorder %s24, 0
      %p114 = por %p112, %p113
      %s116 = sadd.s32 %s115, 1
      %p119 = scmp.eq.s32.totalorder %s18, 1
      %p120 = scmp.ne.s32.totalorder %s115, %s117
      %p121 = scmp.eq.s32.totalorder %s18, 0
      %p122 = por %p120, %p121
      %p123 = scmp.ne.s32.totalorder %s115, %s117
      %p124 = scmp.eq.s32.totalorder %s23, 1
      %p125 = por %p123, %p124
      %p126 = scmp.ne.s32.totalorder %s117, %s118
      %p127 = scmp.eq.s32.totalorder %s23, 0
      %p128 = por %p126, %p127
      %p129 = scmp.ne.s32.totalorder %s117, %s118
      %p130 = scmp.eq.s32.totalorder %s24, 1
      %p131 = por %p129, %p130
      %p133 = scmp.ne.s32.totalorder %s118, %s132
      %p134 = scmp.eq.s32.totalorder %s24, 0
      %p135 = por %p133, %p134
      %s137 = sadd.s32 %s136, 1
      %p140 = scmp.eq.s32.totalorder %s18, 1
      %p141 = scmp.ne.s32.totalorder %s136, %s138
      %p142 = scmp.eq.s32.totalorder %s18, 0
      %p143 = por %p141, %p142
      %p144 = scmp.ne.s32.totalorder %s136, %s138
      %p145 = scmp.eq.s32.totalorder %s23, 1
      %p146 = por %p144, %p145
      %p147 = scmp.ne.s32.totalorder %s138, %s139
      %p148 = scmp.eq.s32.totalorder %s23, 0
      %p149 = por %p147, %p148
      %p150 = scmp.ne.s32.totalorder %s138, %s139
      %p151 = scmp.eq.s32.totalorder %s24, 1
      %p152 = por %p150, %p151
      %p154 = scmp.ne.s32.totalorder %s139, %s153
      %p155 = scmp.eq.s32.totalorder %s24, 0
      %p156 = por %p154, %p155
      %s158 = sadd.s32 %s157, 1
      %p161 = scmp.eq.s32.totalorder %s18, 1
      %p162 = scmp.ne.s32.totalorder %s157, %s159
      %p163 = scmp.eq.s32.totalorder %s18, 0
      %p164 = por %p162, %p163
      %p165 = scmp.ne.s32.totalorder %s157, %s159
      %p166 = scmp.eq.s32.totalorder %s23, 1
      %p167 = por %p165, %p166
      %p168 = scmp.ne.s32.totalorder %s159, %s160
      %p169 = scmp.eq.s32.totalorder %s23, 0
      %p170 = por %p168, %p169
      %p171 = scmp.ne.s32.totalorder %s159, %s160
      %p172 = scmp.eq.s32.totalorder %s24, 1
      %p173 = por %p171, %p172
      %p175 = scmp.ne.s32.totalorder %s160, %s174
      %p176 = scmp.eq.s32.totalorder %s24, 0
      %p177 = por %p175, %p176
      %s179 = sadd.s32 %s178, 1
      %p182 = scmp.eq.s32.totalorder %s18, 1
      %p183 = scmp.ne.s32.totalorder %s178, %s180
      %p184 = scmp.eq.s32.totalorder %s18, 0
      %p185 = por %p183, %p184
      %p186 = scmp.ne.s32.totalorder %s178, %s180
      %p187 = scmp.eq.s32.totalorder %s23, 1
      %p188 = por %p186, %p187
      %p189 = scmp.ne.s32.totalorder %s180, %s181
      %p190 = scmp.eq.s32.totalorder %s23, 0
      %p191 = por %p189, %p190
      %p192 = scmp.ne.s32.totalorder %s180, %s181
      %p193 = scmp.eq.s32.totalorder %s24, 1
      %p194 = por %p192, %p193
      %p196 = scmp.ne.s32.totalorder %s181, %s195
      %p197 = scmp.eq.s32.totalorder %s24, 0
      %p198 = por %p196, %p197
      %s200 = sadd.s32 %s199, 1
      %p203 = scmp.eq.s32.totalorder %s18, 1
      %p204 = scmp.ne.s32.totalorder %s199, %s201
      %p205 = scmp.eq.s32.totalorder %s18, 0
      %p206 = por %p204, %p205
      %p207 = scmp.ne.s32.totalorder %s199, %s201
      %p208 = scmp.eq.s32.totalorder %s23, 1
      %p209 = por %p207, %p208
      %p210 = scmp.ne.s32.totalorder %s201, %s202
      %p211 = scmp.eq.s32.totalorder %s23, 0
      %p212 = por %p210, %p211
      %p213 = scmp.ne.s32.totalorder %s201, %s202
      %p214 = scmp.eq.s32.totalorder %s24, 1
      %p215 = por %p213, %p214
      %p217 = scmp.ne.s32.totalorder %s202, %s216
      %p218 = scmp.eq.s32.totalorder %s24, 0
      %p219 = por %p217, %p218
      %s220 = ssub.s32 %s18, %s25
      %p221 = scmp.eq.s32.totalorder %s220, 0
      %s223 = sadd.s32 %s222, 1
      %s224 = scalar_select %p221, %s222, %s223
      %p227 = pneg %p221
      %p228 = scmp.eq.s32.totalorder %s18, 1
      %p229 = por %p227, %p228
      %p230 = scmp.ne.s32.totalorder %s222, %s225
      %p231 = scmp.eq.s32.totalorder %s18, 0
      %p232 = por %p230, %p231
      %p233 = scmp.ne.s32.totalorder %s222, %s225
      %p234 = scmp.eq.s32.totalorder %s23, 1
      %p235 = por %p233, %p234
      %p236 = scmp.ne.s32.totalorder %s225, %s226
      %p237 = scmp.eq.s32.totalorder %s23, 0
      %p238 = por %p236, %p237
      %p239 = scmp.ne.s32.totalorder %s225, %s226
      %p240 = scmp.eq.s32.totalorder %s24, 1
      %p241 = por %p239, %p240
      %p243 = scmp.ne.s32.totalorder %s226, %s242
      %p244 = scmp.eq.s32.totalorder %s24, 0
      %p245 = por %p243, %p244
      %p246 = scmp.le.s32.totalorder 1, %s18
      %p247 = scmp.lt.s32.totalorder %s18, 3
      %p248 = pnand %p246, %p247
      %p249 = pneg %p248
      // Predicated region
      $region9: #{tpu_custom_call.1} parent=5 // pred_check
        _
      $region10: #{tpu_custom_call.1} parent=5 // pred_check_branch
        %251 = sbr.rel (%p248) target = $region12
      $region11: #{tpu_custom_call.1} parent=5 // pred_region
        %s252 = ssub.s32 %s18, 1
        // Predicated region
        $region13: #{tpu_custom_call.1} parent=11 // pred_check
          %p253 = pneg %p65
        $region14: #{tpu_custom_call.1} parent=11 // pred_check_branch
          %255 = sbr.rel (%p253) target = $region16
        $region15: #{tpu_custom_call.1} parent=11 // pred_region
          _
        $region16: #{tpu_custom_call.1} parent=11 // pred_fallthru
          _
        // Predicated region
        $region17: #{tpu_custom_call.1} parent=11 // pred_check
          %p256 = pneg %p86
        $region18: #{tpu_custom_call.1} parent=11 // pred_check_branch
          %258 = sbr.rel (%p256) target = $region20
        $region19: #{tpu_custom_call.1} parent=11 // pred_region
          _
        $region20: #{tpu_custom_call.1} parent=11 // pred_fallthru
          _
        // Predicated region
        $region21: #{tpu_custom_call.1} parent=11 // pred_check
          %p259 = pneg %p107
        $region22: #{tpu_custom_call.1} parent=11 // pred_check_branch
          %261 = sbr.rel (%p259) target = $region24
        $region23: #{tpu_custom_call.1} parent=11 // pred_region
          _
        $region24: #{tpu_custom_call.1} parent=11 // pred_fallthru
          _
        // Predicated region
        $region25: #{tpu_custom_call.1} parent=11 // pred_check
          %p262 = pneg %p128
        $region26: #{tpu_custom_call.1} parent=11 // pred_check_branch
          %264 = sbr.rel (%p262) target = $region28
        $region27: #{tpu_custom_call.1} parent=11 // pred_region
          _
        $region28: #{tpu_custom_call.1} parent=11 // pred_fallthru
          _
        // Predicated region
        $region29: #{tpu_custom_call.1} parent=11 // pred_check
          %p265 = pneg %p149
        $region30: #{tpu_custom_call.1} parent=11 // pred_check_branch
          %267 = sbr.rel (%p265) target = $region32
        $region31: #{tpu_custom_call.1} parent=11 // pred_region
          _
        $region32: #{tpu_custom_call.1} parent=11 // pred_fallthru
          _
        // Predicated region
        $region33: #{tpu_custom_call.1} parent=11 // pred_check
          %p268 = pneg %p170
        $region34: #{tpu_custom_call.1} parent=11 // pred_check_branch
          %270 = sbr.rel (%p268) target = $region36
        $region35: #{tpu_custom_call.1} parent=11 // pred_region
          _
        $region36: #{tpu_custom_call.1} parent=11 // pred_fallthru
          _
        // Predicated region
        $region37: #{tpu_custom_call.1} parent=11 // pred_check
          %p271 = pneg %p191
        $region38: #{tpu_custom_call.1} parent=11 // pred_check_branch
          %273 = sbr.rel (%p271) target = $region40
        $region39: #{tpu_custom_call.1} parent=11 // pred_region
          _
        $region40: #{tpu_custom_call.1} parent=11 // pred_fallthru
          _
        // Predicated region
        $region41: #{tpu_custom_call.1} parent=11 // pred_check
          %p274 = pneg %p212
        $region42: #{tpu_custom_call.1} parent=11 // pred_check_branch
          %276 = sbr.rel (%p274) target = $region44
        $region43: #{tpu_custom_call.1} parent=11 // pred_region
          _
        $region44: #{tpu_custom_call.1} parent=11 // pred_fallthru
          _
      $region12: #{tpu_custom_call.1} parent=5 // pred_fallthru
        _
      %p277 = scmp.lt.s32.totalorder %s18, 2
      // Predicated region
      $region45: #{tpu_custom_call.1} parent=5 // pred_check
        %p278 = pneg %p277
      $region46: #{tpu_custom_call.1} parent=5 // pred_check_branch
        %280 = sbr.rel (%p278) target = $region48
      $region47: #{tpu_custom_call.1} parent=5 // pred_region
        // Predicated region
        $region49: #{tpu_custom_call.1} parent=47 // pred_check
          %p281 = pneg %p38
        $region50: #{tpu_custom_call.1} parent=47 // pred_check_branch
          %283 = sbr.rel (%p281) target = $region52
        $region51: #{tpu_custom_call.1} parent=47 // pred_region
          %p284 = scmp.lt.s32.totalorder %s18, 1
          %s285 = scalar_select %p284, %s18, 1
          %s286 = smul.addr %s285, 2
          %s287 = smul.addr %s286, 8
          %s288 = scalar_lea.vmem %s0, %s287
        $region52: #{tpu_custom_call.1} parent=47 // pred_fallthru
          _
      $region48: #{tpu_custom_call.1} parent=5 // pred_fallthru
        _
      %p289 = scmp.le.s32.totalorder 1, %s18
      %p290 = scmp.lt.s32.totalorder %s18, 3
      %p291 = pnand %p289, %p290
      %p292 = pneg %p291
      // Predicated region
      $region53: #{tpu_custom_call.1} parent=5 // pred_check
        _
      $region54: #{tpu_custom_call.1} parent=5 // pred_check_branch
        %294 = sbr.rel (%p291) target = $region56
      $region55: #{tpu_custom_call.1} parent=5 // pred_region
        %s295 = ssub.s32 %s18, 1
        %p296 = scmp.lt.s32.totalorder %s23, 1
        %s297 = scalar_select %p296, %s23, 1
        %s298 = smul.addr %s297, 2
        %s299 = smul.addr %s298, 8
        %s300 = scalar_lea.vmem %s0, %s299
        %p301 = pneg %p44
        %p302 = pneg %p41
        %p303 = pneg %p65
        %p304 = pneg %p62
        %p305 = pneg %p86
        %p306 = pneg %p83
        %p307 = pneg %p107
        %p308 = pneg %p104
        %p309 = pneg %p128
        %p310 = pneg %p125
        %p311 = pneg %p149
        %p312 = pneg %p146
        %p313 = pneg %p170
        %p314 = pneg %p167
        %p315 = pneg %p191
        %p316 = pneg %p188
        %p317 = pneg %p212
        %p318 = pneg %p209
        %p319 = pneg %p238
        %p320 = pneg %p235
        %s321 = sand.u32 %s225, 1
        %s322 = scalar_lea.sflag [#allocation3], %s321
        %s323 = sand.u32 %s225, 1
        %s324 = smul.addr %s323, 32
        %s325 = scalar_lea.vmem [#allocation2], %s324
        %p326 = scmp.lt.s32.totalorder %s23, 1
        %s327 = scalar_select %p326, %s23, 1
        %s328 = smul.addr %s327, 2
        %s329 = smul.addr %s328, 8
        %s330 = scalar_lea.vmem %s0, %s329
        %v331 = vld [vmem:[%s330] sm:$0xff]
        %v332 = vld [vmem:[%s330 + $0x8] sm:$0xff]
        %v333 = vld [vmem:[%s4] sm:$0xff]
        %v334 = vld [vmem:[%s4 + $0x8] sm:$0xff]
        %v335 = vld [vmem:[%s1] sm:$0xff]
        %v336 = vld [vmem:[%s1 + $0x8] sm:$0xff]
        %v337 = vld [vmem:[%s1 + $0x10] sm:$0xff]
        %v338 = vld [vmem:[%s1 + $0x18] sm:$0xff]
        %vm339 = vcmask 64512
        %v341 = vsel %vm339, %v335, 0
        %v344 = vsel %vm339, %v336, 0
        %v347 = vsel %vm339, %v337, 0
        %v350 = vsel %vm339, %v338, 0
        %352 = vmatprep.subr.mxu0 %v332
        %353 = vmatpush1.msra.mxu0 %v331
        %354 = vmatprep.subr.mxu0 0.0
        %355 = vmatpush1.msra.mxu0 0.0
        %356 = vmatprep.subr.mxu0 0.0
        %357 = vmatpush1.msra.mxu0 0.0
        %358 = vmatprep.subr.mxu0 0.0
        %359 = vmatpush1.msra.mxu0 0.0
        %360 = vmatprep.subr.mxu0 0.0
        %361 = vmatpush1.msra.mxu0 0.0
        %362 = vmatprep.subr.mxu0 0.0
        %363 = vmatpush1.msra.mxu0 0.0
        %364 = vmatprep.subr.mxu0 0.0
        %365 = vmatpush1.msra.mxu0 0.0
        %366 = vmatprep.subr.mxu0 0.0
        %367 = vmatpush1.msra.mxu0 0.0
        %368 = vmatprep.subr.mxu0 0.0
        %369 = vmatpush1.msra.mxu0 0.0
        %370 = vmatprep.subr.mxu0 0.0
        %371 = vmatpush1.msra.mxu0 0.0
        %372 = vmatprep.subr.mxu0 0.0
        %373 = vmatpush1.msra.mxu0 0.0
        %374 = vmatprep.subr.mxu0 0.0
        %375 = vmatpush1.msra.mxu0 0.0
        %376 = vmatprep.subr.mxu0 0.0
        %377 = vmatpush1.msra.mxu0 0.0
        %378 = vmatprep.subr.mxu0 0.0
        %379 = vmatpush1.msra.mxu0 0.0
        %380 = vmatprep.subr.mxu0 0.0
        %381 = vmatpush1.msra.mxu0 0.0
        %382 = vmatprep.subr.mxu0 0.0
        %383 = vmatpush1.msra.mxu0 0.0
        %384 = vmatprep.subr.mxu0 0.0
        %385 = vmatpush1.msra.mxu0 0.0
        %386 = vmatprep.subr.mxu0 0.0
        %387 = vmatpush1.msra.mxu0 0.0
        %388 = vmatprep.subr.mxu0 0.0
        %389 = vmatpush1.msra.mxu0 0.0
        %390 = vmatprep.subr.mxu0 0.0
        %391 = vmatpush1.msra.mxu0 0.0
        %392 = vmatprep.subr.mxu0 0.0
        %393 = vmatpush1.msra.mxu0 0.0
        %394 = vmatprep.subr.mxu0 0.0
        %395 = vmatpush1.msra.mxu0 0.0
        %396 = vmatprep.subr.mxu0 0.0
        %397 = vmatpush1.msra.mxu0 0.0
        %398 = vmatprep.subr.mxu0 0.0
        %399 = vmatpush1.msra.mxu0 0.0
        %400 = vmatprep.subr.mxu0 0.0
        %401 = vmatpush1.msra.mxu0 0.0
        %402 = vmatprep.subr.mxu0 0.0
        %403 = vmatpush1.msra.mxu0 0.0
        %404 = vmatprep.subr.mxu0 0.0
        %405 = vmatpush1.msra.mxu0 0.0
        %406 = vmatprep.subr.mxu0 0.0
        %407 = vmatpush1.msra.mxu0 0.0
        %408 = vmatprep.subr.mxu0 0.0
        %409 = vmatpush1.msra.mxu0 0.0
        %410 = vmatprep.subr.mxu0 0.0
        %411 = vmatpush1.msra.mxu0 0.0
        %412 = vmatprep.subr.mxu0 0.0
        %413 = vmatpush1.msra.mxu0 0.0
        %414 = vmatprep.subr.mxu0 0.0
        %415 = vmatpush1.msra.mxu0 0.0
        %416 = vmatprep.mubr.f32.mxu0 0.0
        %417 = vmatmul.mubr.f32.gmra.mrb[0].mxu0 %v341
        %v418 = vpop.f32.mrb[0].mxu0
        %v419 = vadd.f32 0.0, %v418
        %v420 = vpop.f32.mrb[0].mxu0
        %v421 = vadd.f32 0.0, %v420
        %422 = vmatprep.mubr.f32.mxu0 0.0
        %423 = vmatmul.mubr.f32.gmra.mrb[0].mxu0 %v344
        %v424 = vpop.f32.mrb[0].mxu0
        %v425 = vadd.f32 0.0, %v424
        %v426 = vpop.f32.mrb[0].mxu0
        %v427 = vadd.f32 0.0, %v426
        %428 = vmatprep.mubr.f32.mxu0 0.0
        %429 = vmatmul.mubr.f32.gmra.mrb[0].mxu0 %v347
        %v430 = vpop.f32.mrb[0].mxu0
        %v431 = vadd.f32 0.0, %v430
        %v432 = vpop.f32.mrb[0].mxu0
        %v433 = vadd.f32 0.0, %v432
        %434 = vmatprep.mubr.f32.mxu0 0.0
        %435 = vmatmul.mubr.f32.gmra.mrb[0].mxu0 %v350
        %v436 = vpop.f32.mrb[0].mxu0
        %v437 = vadd.f32 0.0, %v436
        %v438 = vpop.f32.mrb[0].mxu0
        %v439 = vadd.f32 0.0, %v438
        %440 = vdwg.mxu0
        %442 = vset.pattern.permute.xlu0 0
        %443 = vperm.xlu0 %442, %v333
        %v444 = vpop.permute.xlu0 %443
        %447 = vset.pattern.permute.xlu0 0
        %448 = vperm.xlu0 %447, %v334
        %v449 = vpop.permute.xlu0 %448
        %v451 = vadd.f32 %v419, %v444
        %v452 = vadd.f32 %v421, %v444
        %v453 = vadd.f32 %v425, %v449
        %v454 = vadd.f32 %v427, %v449
        %v455 = vmax.f32 %v451, 0.0
        %v456 = vmax.f32 %v452, 0.0
        %v457 = vmax.f32 %v453, 0.0
        %v458 = vmax.f32 %v454, 0.0
        %459 = vrot.lane.b32.xlu0 %v455, 9
        %v460 = vpop.permute.xlu0 %459
        %461 = vrot.lane.b32.xlu0 %v457, 9
        %v462 = vpop.permute.xlu0 %461
        %463 = vrot.lane.b32.xlu0 %v456, 9
        %v464 = vpop.permute.xlu0 %463
        %465 = vrot.lane.b32.xlu0 %v458, 9
        %v466 = vpop.permute.xlu0 %465
        %v467 = vlaneseq
        %v468 = vand.u32 %v467, 127
        %vm469 = vcmp.lt.s32.totalorder %v468, 9
        %v470 = vsel %vm469, %v460, %v464
        %v471 = vsel %vm469, %v462, %v466
        %v472 = vsel %vm469, %v464, %v460
        %v473 = vsel %vm469, %v466, %v462
        %v474 = vld [vmem:[%s3] sm:$0x3]
        %v476 = vlaneseq
        %v477 = vshrl.u32 %v476, 7
        %v478 = vsub.s32 0, %v477
        %v479 = vrot.slane %v474, %v478
        %v480 = vlaneseq
        %v481 = vshrl.u32 %v480, 7
        %v482 = vsub.s32 1, %v481
        %v483 = vrot.slane %v474, %v482
        %v486 = vmul.f32 %v472, %v479
        %v487 = vmul.f32 %v470, %v483
        %v488 = vmul.f32 %v473, %v479
        %v489 = vmul.f32 %v471, %v483
        %490 = vrot.lane.b32.xlu0 %v455, 8
        %v491 = vpop.permute.xlu0 %490
        %492 = vrot.lane.b32.xlu0 %v457, 8
        %v493 = vpop.permute.xlu0 %492
        %494 = vrot.lane.b32.xlu0 %v456, 8
        %v495 = vpop.permute.xlu0 %494
        %496 = vrot.lane.b32.xlu0 %v458, 8
        %v497 = vpop.permute.xlu0 %496
        %vm498 = vcmp.lt.s32.totalorder %v468, 8
        %v499 = vsel %vm498, %v491, %v495
        %v500 = vsel %vm498, %v493, %v497
        %v501 = vsel %vm498, %v495, %v491
        %v502 = vsel %vm498, %v497, %v493
        %s503 = scalar_lea.vmem %s3, 2
        %v504 = vld [vmem:[%s503] sm:$0x3]
        %v506 = vlaneseq
        %v507 = vshrl.u32 %v506, 7
        %v508 = vsub.s32 0, %v507
        %v509 = vrot.slane %v504, %v508
        %v510 = vlaneseq
        %v511 = vshrl.u32 %v510, 7
        %v512 = vsub.s32 1, %v511
        %v513 = vrot.slane %v504, %v512
        %v516 = vmul.f32 %v501, %v509
        %v517 = vmul.f32 %v499, %v513
        %v518 = vmul.f32 %v502, %v509
        %v519 = vmul.f32 %v500, %v513
        %520 = vrot.lane.b32.xlu0 %v455, 7
        %v521 = vpop.permute.xlu0 %520
        %522 = vrot.lane.b32.xlu0 %v457, 7
        %v523 = vpop.permute.xlu0 %522
        %524 = vrot.lane.b32.xlu0 %v456, 7
        %v525 = vpop.permute.xlu0 %524
        %526 = vrot.lane.b32.xlu0 %v458, 7
        %v527 = vpop.permute.xlu0 %526
        %vm528 = vcmp.lt.s32.totalorder %v468, 7
        %v529 = vsel %vm528, %v521, %v525
        %v530 = vsel %vm528, %v523, %v527
        %v531 = vsel %vm528, %v525, %v521
        %v532 = vsel %vm528, %v527, %v523
        %s533 = scalar_lea.vmem %s3, 4
        %v534 = vld [vmem:[%s533] sm:$0x3]
        %v536 = vlaneseq
        %v537 = vshrl.u32 %v536, 7
        %v538 = vsub.s32 0, %v537
        %v539 = vrot.slane %v534, %v538
        %v540 = vlaneseq
        %v541 = vshrl.u32 %v540, 7
        %v542 = vsub.s32 1, %v541
        %v543 = vrot.slane %v534, %v542
        %v546 = vmul.f32 %v531, %v539
        %v547 = vmul.f32 %v529, %v543
        %v548 = vmul.f32 %v532, %v539
        %v549 = vmul.f32 %v530, %v543
        %550 = vrot.lane.b32.xlu0 %v455, 1
        %v551 = vpop.permute.xlu0 %550
        %552 = vrot.lane.b32.xlu0 %v457, 1
        %v553 = vpop.permute.xlu0 %552
        %554 = vrot.lane.b32.xlu0 %v456, 1
        %v555 = vpop.permute.xlu0 %554
        %556 = vrot.lane.b32.xlu0 %v458, 1
        %v557 = vpop.permute.xlu0 %556
        %vm558 = vcmp.lt.s32.totalorder %v468, 1
        %v559 = vsel %vm558, %v551, %v555
        %v560 = vsel %vm558, %v553, %v557
        %v561 = vsel %vm558, %v555, %v551
        %v562 = vsel %vm558, %v557, %v553
        %s563 = scalar_lea.vmem %s3, 6
        %v564 = vld [vmem:[%s563] sm:$0x3]
        %v566 = vlaneseq
        %v567 = vshrl.u32 %v566, 7
        %v568 = vsub.s32 0, %v567
        %v569 = vrot.slane %v564, %v568
        %v570 = vlaneseq
        %v571 = vshrl.u32 %v570, 7
        %v572 = vsub.s32 1, %v571
        %v573 = vrot.slane %v564, %v572
        %v576 = vmul.f32 %v561, %v569
        %v577 = vmul.f32 %v559, %v573
        %v578 = vmul.f32 %v562, %v569
        %v579 = vmul.f32 %v560, %v573
        %580 = vrot.lane.b32.xlu0 %v455, 127
        %v581 = vpop.permute.xlu0 %580
        %582 = vrot.lane.b32.xlu0 %v457, 127
        %v583 = vpop.permute.xlu0 %582
        %584 = vrot.lane.b32.xlu0 %v456, 127
        %v585 = vpop.permute.xlu0 %584
        %586 = vrot.lane.b32.xlu0 %v458, 127
        %v587 = vpop.permute.xlu0 %586
        %vm588 = vcmp.lt.s32.totalorder %v468, 127
        %v589 = vsel %vm588, %v581, %v585
        %v590 = vsel %vm588, %v583, %v587
        %v591 = vsel %vm588, %v585, %v581
        %v592 = vsel %vm588, %v587, %v583
        %s593 = scalar_lea.vmem %s3, 10
        %v594 = vld [vmem:[%s593] sm:$0x3]
        %v596 = vlaneseq
        %v597 = vshrl.u32 %v596, 7
        %v598 = vsub.s32 0, %v597
        %v599 = vrot.slane %v594, %v598
        %v600 = vlaneseq
        %v601 = vshrl.u32 %v600, 7
        %v602 = vsub.s32 1, %v601
        %v603 = vrot.slane %v594, %v602
        %v606 = vmul.f32 %v589, %v599
        %v607 = vmul.f32 %v591, %v603
        %v608 = vmul.f32 %v590, %v599
        %v609 = vmul.f32 %v592, %v603
        %610 = vrot.lane.b32.xlu0 %v455, 121
        %v611 = vpop.permute.xlu0 %610
        %612 = vrot.lane.b32.xlu0 %v457, 121
        %v613 = vpop.permute.xlu0 %612
        %614 = vrot.lane.b32.xlu0 %v456, 121
        %v615 = vpop.permute.xlu0 %614
        %616 = vrot.lane.b32.xlu0 %v458, 121
        %v617 = vpop.permute.xlu0 %616
        %vm618 = vcmp.lt.s32.totalorder %v468, 121
        %v619 = vsel %vm618, %v611, %v615
        %v620 = vsel %vm618, %v613, %v617
        %v621 = vsel %vm618, %v615, %v611
        %v622 = vsel %vm618, %v617, %v613
        %s623 = scalar_lea.vmem %s3, 12
        %v624 = vld [vmem:[%s623] sm:$0x3]
        %v626 = vlaneseq
        %v627 = vshrl.u32 %v626, 7
        %v628 = vsub.s32 0, %v627
        %v629 = vrot.slane %v624, %v628
        %v630 = vlaneseq
        %v631 = vshrl.u32 %v630, 7
        %v632 = vsub.s32 1, %v631
        %v633 = vrot.slane %v624, %v632
        %v636 = vmul.f32 %v619, %v629
        %v637 = vmul.f32 %v621, %v633
        %v638 = vmul.f32 %v620, %v629
        %v639 = vmul.f32 %v622, %v633
        %640 = vrot.lane.b32.xlu0 %v455, 120
        %v641 = vpop.permute.xlu0 %640
        %642 = vrot.lane.b32.xlu0 %v457, 120
        %v643 = vpop.permute.xlu0 %642
        %644 = vrot.lane.b32.xlu0 %v456, 120
        %v645 = vpop.permute.xlu0 %644
        %646 = vrot.lane.b32.xlu0 %v458, 120
        %v647 = vpop.permute.xlu0 %646
        %vm648 = vcmp.lt.s32.totalorder %v468, 120
        %v649 = vsel %vm648, %v641, %v645
        %v650 = vsel %vm648, %v643, %v647
        %v651 = vsel %vm648, %v645, %v641
        %v652 = vsel %vm648, %v647, %v643
        %s653 = scalar_lea.vmem %s3, 14
        %v654 = vld [vmem:[%s653] sm:$0x3]
        %v656 = vlaneseq
        %v657 = vshrl.u32 %v656, 7
        %v658 = vsub.s32 0, %v657
        %v659 = vrot.slane %v654, %v658
        %v660 = vlaneseq
        %v661 = vshrl.u32 %v660, 7
        %v662 = vsub.s32 1, %v661
        %v663 = vrot.slane %v654, %v662
        %v666 = vmul.f32 %v649, %v659
        %v667 = vmul.f32 %v651, %v663
        %v668 = vmul.f32 %v650, %v659
        %v669 = vmul.f32 %v652, %v663
        %670 = vrot.lane.b32.xlu0 %v455, 119
        %v671 = vpop.permute.xlu0 %670
        %672 = vrot.lane.b32.xlu0 %v457, 119
        %v673 = vpop.permute.xlu0 %672
        %674 = vrot.lane.b32.xlu0 %v456, 119
        %v675 = vpop.permute.xlu0 %674
        %676 = vrot.lane.b32.xlu0 %v458, 119
        %v677 = vpop.permute.xlu0 %676
        %vm678 = vcmp.lt.s32.totalorder %v468, 119
        %v679 = vsel %vm678, %v671, %v675
        %v680 = vsel %vm678, %v673, %v677
        %v681 = vsel %vm678, %v675, %v671
        %v682 = vsel %vm678, %v677, %v673
        %s683 = scalar_lea.vmem %s3, 16
        %v684 = vld [vmem:[%s683] sm:$0x3]
        %v686 = vlaneseq
        %v687 = vshrl.u32 %v686, 7
        %v688 = vsub.s32 0, %v687
        %v689 = vrot.slane %v684, %v688
        %v690 = vlaneseq
        %v691 = vshrl.u32 %v690, 7
        %v692 = vsub.s32 1, %v691
        %v693 = vrot.slane %v684, %v692
        %v696 = vmul.f32 %v679, %v689
        %v697 = vmul.f32 %v681, %v693
        %v698 = vmul.f32 %v680, %v689
        %v699 = vmul.f32 %v682, %v693
        %v700 = vld [vmem:[%s2] sm:$0xff]
        %v701 = vld [vmem:[%s2 + $0x8] sm:$0xff]
        %v702 = vld [vmem:[%s2 + $0x10] sm:$0xff]
        %v703 = vld [vmem:[%s2 + $0x18] sm:$0xff]
        %704 = vset.pattern.permute.xlu0 1
        %705 = vperm.xlu0 %704, %v333
        %v706 = vpop.permute.xlu0 %705
        %708 = vset.pattern.permute.xlu0 1
        %709 = vperm.xlu0 %708, %v334
        %v710 = vpop.permute.xlu0 %709
        %vm712 = vcmask 130048
        %v714 = vsel %vm712, %v701, 0
        %v717 = vsel %vm712, %v703, 0
        %719 = vmatprep.subr.mxu0 %v487
        %720 = vmatpush1.msra.mxu0 %v486
        %721 = vmatprep.subr.mxu0 %v489
        %722 = vmatpush1.msra.mxu0 %v488
        %723 = vmatprep.subr.mxu0 %v517
        %724 = vmatpush1.msra.mxu0 %v516
        %725 = vmatprep.subr.mxu0 %v519
        %726 = vmatpush1.msra.mxu0 %v518
        %727 = vmatprep.subr.mxu0 %v547
        %728 = vmatpush1.msra.mxu0 %v546
        %729 = vmatprep.subr.mxu0 %v549
        %730 = vmatpush1.msra.mxu0 %v548
        %731 = vmatprep.subr.mxu0 %v577
        %732 = vmatpush1.msra.mxu0 %v576
        %733 = vmatprep.subr.mxu0 %v579
        %734 = vmatpush1.msra.mxu0 %v578
        %735 = vmatprep.subr.mxu0 %v456
        %736 = vmatpush1.msra.mxu0 %v455
        %737 = vmatprep.subr.mxu0 %v458
        %738 = vmatpush1.msra.mxu0 %v457
        %739 = vmatprep.subr.mxu0 %v607
        %740 = vmatpush1.msra.mxu0 %v606
        %741 = vmatprep.subr.mxu0 %v609
        %742 = vmatpush1.msra.mxu0 %v608
        %743 = vmatprep.subr.mxu0 %v637
        %744 = vmatpush1.msra.mxu0 %v636
        %745 = vmatprep.subr.mxu0 %v639
        %746 = vmatpush1.msra.mxu0 %v638
        %747 = vmatprep.subr.mxu0 %v667
        %748 = vmatpush1.msra.mxu0 %v666
        %749 = vmatprep.subr.mxu0 %v669
        %750 = vmatpush1.msra.mxu0 %v668
        %751 = vmatprep.subr.mxu0 %v697
        %752 = vmatpush1.msra.mxu0 %v696
        %753 = vmatprep.subr.mxu0 %v699
        %754 = vmatpush1.msra.mxu0 %v698
        %755 = vmatprep.subr.mxu0 0.0
        %756 = vmatpush1.msra.mxu0 0.0
        %757 = vmatprep.subr.mxu0 0.0
        %758 = vmatpush1.msra.mxu0 0.0
        %759 = vmatprep.subr.mxu0 0.0
        %760 = vmatpush1.msra.mxu0 0.0
        %761 = vmatprep.subr.mxu0 0.0
        %762 = vmatpush1.msra.mxu0 0.0
        %763 = vmatprep.subr.mxu0 0.0
        %764 = vmatpush1.msra.mxu0 0.0
        %765 = vmatprep.subr.mxu0 0.0
        %766 = vmatpush1.msra.mxu0 0.0
        %767 = vmatprep.subr.mxu0 0.0
        %768 = vmatpush1.msra.mxu0 0.0
        %769 = vmatprep.subr.mxu0 0.0
        %770 = vmatpush1.msra.mxu0 0.0
        %771 = vmatprep.subr.mxu0 0.0
        %772 = vmatpush1.msra.mxu0 0.0
        %773 = vmatprep.subr.mxu0 0.0
        %774 = vmatpush1.msra.mxu0 0.0
        %775 = vmatprep.subr.mxu0 0.0
        %776 = vmatpush1.msra.mxu0 0.0
        %777 = vmatprep.subr.mxu0 0.0
        %778 = vmatpush1.msra.mxu0 0.0
        %779 = vmatprep.subr.mxu0 0.0
        %780 = vmatpush1.msra.mxu0 0.0
        %781 = vmatprep.subr.mxu0 0.0
        %782 = vmatpush1.msra.mxu0 0.0
        %783 = vmatprep.mubr.f32.mxu0 %v714
        %784 = vmatmul.mubr.f32.gmra.mrb[0].mxu0 %v700
        %v785 = vpop.f32.mrb[0].mxu0
        %v786 = vadd.f32 %v706, %v785
        %v787 = vpop.f32.mrb[0].mxu0
        %v788 = vadd.f32 %v706, %v787
        %789 = vmatprep.mubr.f32.mxu0 %v717
        %790 = vmatmul.mubr.f32.gmra.mrb[0].mxu0 %v702
        %v791 = vpop.f32.mrb[0].mxu0
        %v792 = vadd.f32 %v710, %v791
        %v793 = vpop.f32.mrb[0].mxu0
        %v794 = vadd.f32 %v710, %v793
        %795 = vdwg.mxu0
        %v796 = vmax.f32 %v786, 0.0
        %v797 = vmax.f32 %v788, 0.0
        %v798 = vmax.f32 %v792, 0.0
        %v799 = vmax.f32 %v794, 0.0
        %800 = vadd.xlane.f32.xlu0 %v796
        %v801 = vpop.xlane.xlu0 %800
        %802 = vadd.xlane.f32.xlu0 %v798
        %v803 = vpop.xlane.xlu0 %802
        %804 = vadd.xlane.f32.xlu0 %v797
        %v805 = vpop.xlane.xlu0 %804
        %806 = vadd.xlane.f32.xlu0 %v799
        %v807 = vpop.xlane.xlu0 %806
        %vm808 = vcmask 7168
        %v809 = vsel %vm808, %v801, %v805
        %v810 = vsel %vm808, %v803, %v807
        %v811 = vld [vmem:[%s5] sm:$0x3]
        %v812 = vld [vmem:[%s6] sm:$0x3]
        %814 = vset.pattern.permute.xlu0 0
        %815 = vperm.xlu0 %814, %v812
        %v816 = vpop.permute.xlu0 %815
        %v819 = vsel %vm712, %v811, 0
        %821 = vmatprep.subr.mxu0 0.0
        %822 = vmatpush1.msra.mxu0 %v809
        %823 = vmatprep.subr.mxu0 0.0
        %824 = vmatpush1.msra.mxu0 %v810
        %825 = vmatprep.subr.mxu0 0.0
        %826 = vmatpush1.msra.mxu0 0.0
        %827 = vmatprep.subr.mxu0 0.0
        %828 = vmatpush1.msra.mxu0 0.0
        %829 = vmatprep.subr.mxu0 0.0
        %830 = vmatpush1.msra.mxu0 0.0
        %831 = vmatprep.subr.mxu0 0.0
        %832 = vmatpush1.msra.mxu0 0.0
        %833 = vmatprep.subr.mxu0 0.0
        %834 = vmatpush1.msra.mxu0 0.0
        %835 = vmatprep.subr.mxu0 0.0
        %836 = vmatpush1.msra.mxu0 0.0
        %837 = vmatprep.subr.mxu0 0.0
        %838 = vmatpush1.msra.mxu0 0.0
        %839 = vmatprep.subr.mxu0 0.0
        %840 = vmatpush1.msra.mxu0 0.0
        %841 = vmatprep.subr.mxu0 0.0
        %842 = vmatpush1.msra.mxu0 0.0
        %843 = vmatprep.subr.mxu0 0.0
        %844 = vmatpush1.msra.mxu0 0.0
        %845 = vmatprep.subr.mxu0 0.0
        %846 = vmatpush1.msra.mxu0 0.0
        %847 = vmatprep.subr.mxu0 0.0
        %848 = vmatpush1.msra.mxu0 0.0
        %849 = vmatprep.subr.mxu0 0.0
        %850 = vmatpush1.msra.mxu0 0.0
        %851 = vmatprep.subr.mxu0 0.0
        %852 = vmatpush1.msra.mxu0 0.0
        %853 = vmatprep.subr.mxu0 0.0
        %854 = vmatpush1.msra.mxu0 0.0
        %855 = vmatprep.subr.mxu0 0.0
        %856 = vmatpush1.msra.mxu0 0.0
        %857 = vmatprep.subr.mxu0 0.0
        %858 = vmatpush1.msra.mxu0 0.0
        %859 = vmatprep.subr.mxu0 0.0
        %860 = vmatpush1.msra.mxu0 0.0
        %861 = vmatprep.subr.mxu0 0.0
        %862 = vmatpush1.msra.mxu0 0.0
        %863 = vmatprep.subr.mxu0 0.0
        %864 = vmatpush1.msra.mxu0 0.0
        %865 = vmatprep.subr.mxu0 0.0
        %866 = vmatpush1.msra.mxu0 0.0
        %867 = vmatprep.subr.mxu0 0.0
        %868 = vmatpush1.msra.mxu0 0.0
        %869 = vmatprep.subr.mxu0 0.0
        %870 = vmatpush1.msra.mxu0 0.0
        %871 = vmatprep.subr.mxu0 0.0
        %872 = vmatpush1.msra.mxu0 0.0
        %873 = vmatprep.subr.mxu0 0.0
        %874 = vmatpush1.msra.mxu0 0.0
        %875 = vmatprep.subr.mxu0 0.0
        %876 = vmatpush1.msra.mxu0 0.0
        %877 = vmatprep.subr.mxu0 0.0
        %878 = vmatpush1.msra.mxu0 0.0
        %879 = vmatprep.subr.mxu0 0.0
        %880 = vmatpush1.msra.mxu0 0.0
        %881 = vmatprep.subr.mxu0 0.0
        %882 = vmatpush1.msra.mxu0 0.0
        %883 = vmatprep.subr.mxu0 0.0
        %884 = vmatpush1.msra.mxu0 0.0
        %885 = vmatprep.mubr.f32.mxu0 0.0
        %886 = vmatmul.mubr.f32.gmra.mrb[0].mxu0 %v819
        %v887 = vpop.f32.mrb[0].mxu0
        %v888 = vadd.f32 %v816, %v887
        %v889 = vpop.f32.mrb[0].mxu0
        %890 = vdwg.mxu0
        %v891 = vmax.f32 %v888, 0.0
        %v892 = vld [vmem:[%s7] sm:$0xff]
        %v893 = vld [vmem:[%s7 + $0x8] sm:$0xff]
        %894 = vset.pattern.permute.xlu0 3
        %895 = vperm.xlu0 %894, %v333
        %v896 = vpop.permute.xlu0 %895
        %898 = vset.pattern.permute.xlu0 3
        %899 = vperm.xlu0 %898, %v334
        %v900 = vpop.permute.xlu0 %899
        %vm902 = vcmask 15360
        %v904 = vsel %vm902, %v892, 0
        %v907 = vsel %vm902, %v893, 0
        %vm909 = vcmask 1041408
        %v911 = vsel %vm909, %v891, 0
        %913 = vmatprep.subr.mxu0 0.0
        %914 = vmatpush1.msra.mxu0 %v911
        %915 = vmatprep.subr.mxu0 0.0
        %916 = vmatpush1.msra.mxu0 0.0
        %917 = vmatprep.subr.mxu0 0.0
        %918 = vmatpush1.msra.mxu0 0.0
        %919 = vmatprep.subr.mxu0 0.0
        %920 = vmatpush1.msra.mxu0 0.0
        %921 = vmatprep.subr.mxu0 0.0
        %922 = vmatpush1.msra.mxu0 0.0
        %923 = vmatprep.subr.mxu0 0.0
        %924 = vmatpush1.msra.mxu0 0.0
        %925 = vmatprep.subr.mxu0 0.0
        %926 = vmatpush1.msra.mxu0 0.0
        %927 = vmatprep.subr.mxu0 0.0
        %928 = vmatpush1.msra.mxu0 0.0
        %929 = vmatprep.subr.mxu0 0.0
        %930 = vmatpush1.msra.mxu0 0.0
        %931 = vmatprep.subr.mxu0 0.0
        %932 = vmatpush1.msra.mxu0 0.0
        %933 = vmatprep.subr.mxu0 0.0
        %934 = vmatpush1.msra.mxu0 0.0
        %935 = vmatprep.subr.mxu0 0.0
        %936 = vmatpush1.msra.mxu0 0.0
        %937 = vmatprep.subr.mxu0 0.0
        %938 = vmatpush1.msra.mxu0 0.0
        %939 = vmatprep.subr.mxu0 0.0
        %940 = vmatpush1.msra.mxu0 0.0
        %941 = vmatprep.subr.mxu0 0.0
        %942 = vmatpush1.msra.mxu0 0.0
        %943 = vmatprep.subr.mxu0 0.0
        %944 = vmatpush1.msra.mxu0 0.0
        %945 = vmatprep.subr.mxu0 0.0
        %946 = vmatpush1.msra.mxu0 0.0
        %947 = vmatprep.subr.mxu0 0.0
        %948 = vmatpush1.msra.mxu0 0.0
        %949 = vmatprep.subr.mxu0 0.0
        %950 = vmatpush1.msra.mxu0 0.0
        %951 = vmatprep.subr.mxu0 0.0
        %952 = vmatpush1.msra.mxu0 0.0
        %953 = vmatprep.subr.mxu0 0.0
        %954 = vmatpush1.msra.mxu0 0.0
        %955 = vmatprep.subr.mxu0 0.0
        %956 = vmatpush1.msra.mxu0 0.0
        %957 = vmatprep.subr.mxu0 0.0
        %958 = vmatpush1.msra.mxu0 0.0
        %959 = vmatprep.subr.mxu0 0.0
        %960 = vmatpush1.msra.mxu0 0.0
        %961 = vmatprep.subr.mxu0 0.0
        %962 = vmatpush1.msra.mxu0 0.0
        %963 = vmatprep.subr.mxu0 0.0
        %964 = vmatpush1.msra.mxu0 0.0
        %965 = vmatprep.subr.mxu0 0.0
        %966 = vmatpush1.msra.mxu0 0.0
        %967 = vmatprep.subr.mxu0 0.0
        %968 = vmatpush1.msra.mxu0 0.0
        %969 = vmatprep.subr.mxu0 0.0
        %970 = vmatpush1.msra.mxu0 0.0
        %971 = vmatprep.subr.mxu0 0.0
        %972 = vmatpush1.msra.mxu0 0.0
        %973 = vmatprep.subr.mxu0 0.0
        %974 = vmatpush1.msra.mxu0 0.0
        %975 = vmatprep.subr.mxu0 0.0
        %976 = vmatpush1.msra.mxu0 0.0
        %977 = vmatprep.mubr.f32.mxu0 0.0
        %978 = vmatmul.mubr.f32.gmra.mrb[0].mxu0 %v904
        %v979 = vpop.f32.mrb[0].mxu0
        %v980 = vadd.f32 %v896, %v979
        %v981 = vpop.f32.mrb[0].mxu0
        %982 = vmatprep.mubr.f32.mxu0 0.0
        %983 = vmatmul.mubr.f32.gmra.mrb[0].mxu0 %v907
        %v984 = vpop.f32.mrb[0].mxu0
        %v985 = vadd.f32 %v900, %v984
        %v986 = vpop.f32.mrb[0].mxu0
        %987 = vdwg.mxu0
        %v988 = vxor.u32 %v980, 2147483648
        %v989 = vxor.u32 %v985, 2147483648
        %v990 = vmul.f32 %v988, 1.442695
        %v991 = vpow.pop %v990
        %v992 = vmul.f32 %v989, 1.442695
        %v993 = vpow.pop %v992
        %v994 = vadd.f32 %v991, 1.0
        %v995 = vadd.f32 %v993, 1.0
        %v996 = vrcp.pop %v994
        %v997 = vmul.f32 1.0, %v996
        %v998 = vrcp.pop %v995
        %v999 = vmul.f32 1.0, %v998
        %1001 = vset.pattern.permute.xlu0 0
        %1002 = vperm.xlu0 %1001, %v997
        %v1003 = vpop.permute.xlu0 %1002
        %1006 = vset.pattern.permute.xlu0 0
        %1007 = vperm.xlu0 %1006, %v999
        %v1008 = vpop.permute.xlu0 %1007
        %v1010 = vmul.f32 %v796, %v1003
        %v1011 = vmul.f32 %v798, %v1008
        %1012 = vset.pattern.permute.xlu0 1
        %1013 = vperm.xlu0 %1012, %v997
        %v1014 = vpop.permute.xlu0 %1013
        %1016 = vset.pattern.permute.xlu0 1
        %1017 = vperm.xlu0 %1016, %v999
        %v1018 = vpop.permute.xlu0 %1017
        %v1020 = vmul.f32 %v797, %v1014
        %v1021 = vmul.f32 %v799, %v1018
        %v1022 = vld [vmem:[%s8] sm:$0xff]
        %v1023 = vld [vmem:[%s8 + $0x8] sm:$0xff]
        %v1025 = vsel %vm712, %v1022, 0
        %v1028 = vsel %vm712, %v1023, 0
        %1030 = vmatprep.subr.mxu0 %v1020
        %1031 = vmatpush1.msra.mxu0 %v1010
        %1032 = vmatprep.subr.mxu0 %v1021
        %1033 = vmatpush1.msra.mxu0 %v1011
        %1034 = vmatprep.subr.mxu0 0.0
        %1035 = vmatpush1.msra.mxu0 0.0
        %1036 = vmatprep.subr.mxu0 0.0
        %1037 = vmatpush1.msra.mxu0 0.0
        %1038 = vmatprep.subr.mxu0 0.0
        %1039 = vmatpush1.msra.mxu0 0.0
        %1040 = vmatprep.subr.mxu0 0.0
        %1041 = vmatpush1.msra.mxu0 0.0
        %1042 = vmatprep.subr.mxu0 0.0
        %1043 = vmatpush1.msra.mxu0 0.0
        %1044 = vmatprep.subr.mxu0 0.0
        %1045 = vmatpush1.msra.mxu0 0.0
        %1046 = vmatprep.subr.mxu0 0.0
        %1047 = vmatpush1.msra.mxu0 0.0
        %1048 = vmatprep.subr.mxu0 0.0
        %1049 = vmatpush1.msra.mxu0 0.0
        %1050 = vmatprep.subr.mxu0 0.0
        %1051 = vmatpush1.msra.mxu0 0.0
        %1052 = vmatprep.subr.mxu0 0.0
        %1053 = vmatpush1.msra.mxu0 0.0
        %1054 = vmatprep.subr.mxu0 0.0
        %1055 = vmatpush1.msra.mxu0 0.0
        %1056 = vmatprep.subr.mxu0 0.0
        %1057 = vmatpush1.msra.mxu0 0.0
        %1058 = vmatprep.subr.mxu0 0.0
        %1059 = vmatpush1.msra.mxu0 0.0
        %1060 = vmatprep.subr.mxu0 0.0
        %1061 = vmatpush1.msra.mxu0 0.0
        %1062 = vmatprep.subr.mxu0 0.0
        %1063 = vmatpush1.msra.mxu0 0.0
        %1064 = vmatprep.subr.mxu0 0.0
        %1065 = vmatpush1.msra.mxu0 0.0
        %1066 = vmatprep.subr.mxu0 0.0
        %1067 = vmatpush1.msra.mxu0 0.0
        %1068 = vmatprep.subr.mxu0 0.0
        %1069 = vmatpush1.msra.mxu0 0.0
        %1070 = vmatprep.subr.mxu0 0.0
        %1071 = vmatpush1.msra.mxu0 0.0
        %1072 = vmatprep.subr.mxu0 0.0
        %1073 = vmatpush1.msra.mxu0 0.0
        %1074 = vmatprep.subr.mxu0 0.0
        %1075 = vmatpush1.msra.mxu0 0.0
        %1076 = vmatprep.subr.mxu0 0.0
        %1077 = vmatpush1.msra.mxu0 0.0
        %1078 = vmatprep.subr.mxu0 0.0
        %1079 = vmatpush1.msra.mxu0 0.0
        %1080 = vmatprep.subr.mxu0 0.0
        %1081 = vmatpush1.msra.mxu0 0.0
        %1082 = vmatprep.subr.mxu0 0.0
        %1083 = vmatpush1.msra.mxu0 0.0
        %1084 = vmatprep.subr.mxu0 0.0
        %1085 = vmatpush1.msra.mxu0 0.0
        %1086 = vmatprep.subr.mxu0 0.0
        %1087 = vmatpush1.msra.mxu0 0.0
        %1088 = vmatprep.subr.mxu0 0.0
        %1089 = vmatpush1.msra.mxu0 0.0
        %1090 = vmatprep.subr.mxu0 0.0
        %1091 = vmatpush1.msra.mxu0 0.0
        %1092 = vmatprep.subr.mxu0 0.0
        %1093 = vmatpush1.msra.mxu0 0.0
        %1094 = vmatprep.mubr.f32.mxu0 0.0
        %1095 = vmatmul.mubr.f32.gmra.mrb[0].mxu0 %v1025
        %v1096 = vpop.f32.mrb[0].mxu0
        %v1097 = vadd.f32 %v431, %v1096
        %v1098 = vpop.f32.mrb[0].mxu0
        %v1099 = vadd.f32 %v433, %v1098
        %1100 = vmatprep.mubr.f32.mxu0 0.0
        %1101 = vmatmul.mubr.f32.gmra.mrb[0].mxu0 %v1028
        %v1102 = vpop.f32.mrb[0].mxu0
        %v1103 = vadd.f32 %v437, %v1102
        %v1104 = vpop.f32.mrb[0].mxu0
        %v1105 = vadd.f32 %v439, %v1104
        %1106 = vdwg.mxu0
        %1107 = vset.pattern.permute.xlu0 2
        %1108 = vperm.xlu0 %1107, %v333
        %v1109 = vpop.permute.xlu0 %1108
        %1111 = vset.pattern.permute.xlu0 2
        %1112 = vperm.xlu0 %1111, %v334
        %v1113 = vpop.permute.xlu0 %1112
        %v1115 = vadd.f32 %v1097, %v1109
        %v1116 = vadd.f32 %v1099, %v1109
        %v1117 = vadd.f32 %v1103, %v1113
        %v1118 = vadd.f32 %v1105, %v1113
        %v1119 = vmax.f32 %v1115, 0.0
        %v1120 = vmax.f32 %v1116, 0.0
        %v1121 = vmax.f32 %v1117, 0.0
        %v1122 = vmax.f32 %v1118, 0.0
        %1123 = vst [vmem:[%s325] sm:$0xff] %v1119
        %1124 = vst [vmem:[%s325 + $0x8] sm:$0xff] %v1120
        %1125 = vst [vmem:[%s325 + $0x10] sm:$0xff] %v1121
        %1126 = vst [vmem:[%s325 + $0x18] sm:$0xff] %v1122
        %s1127 = sand.u32 %s225, 1
        %s1128 = scalar_lea.sflag [#allocation3], %s1127
        %s1129 = sand.u32 %s225, 1
        %s1130 = smul.addr %s1129, 32
        %s1131 = scalar_lea.vmem [#allocation2], %s1130
        // Predicated region
        $region57: #{tpu_custom_call.1} parent=55 // pred_check
          %p1132 = pneg %p235
        $region58: #{tpu_custom_call.1} parent=55 // pred_check_branch
          %1134 = sbr.rel (%p1132) target = $region60
        $region59: #{tpu_custom_call.1} parent=55 // pred_region
          %s1136 = ssub.s32 512, 512
          %1137 = vsyncadd %s1128, %s1136
          %s1138 = smul.addr %s23, 4
          %s1139 = smul.addr %s1138, 128
          %s1140 = scalar_lea.hbm %s9, %s1139
          %s1141 = sshll.u32 %s1131, 4
          %s1142 = int_to_ptr.vmem [resolvable:$true] %s1141
          %1147 = dma.vmem_to_hbm [thread:$0]  %s1142, 512, %s1140, %s1128, 256, 256, 16
        $region60: #{tpu_custom_call.1} parent=55 // pred_fallthru
          _
      $region56: #{tpu_custom_call.1} parent=5 // pred_fallthru
        _
      %p1148 = scmp.le.s32.totalorder 2, %s18
      // Predicated region
      $region61: #{tpu_custom_call.1} parent=5 // pred_check
        %p1149 = pneg %p1148
      $region62: #{tpu_custom_call.1} parent=5 // pred_check_branch
        %1151 = sbr.rel (%p1149) target = $region64
      $region63: #{tpu_custom_call.1} parent=5 // pred_region
        %s1152 = ssub.s32 %s18, 2
        // Predicated region
        $region65: #{tpu_custom_call.1} parent=63 // pred_check
          %p1153 = pneg %p241
        $region66: #{tpu_custom_call.1} parent=63 // pred_check_branch
          %1155 = sbr.rel (%p1153) target = $region68
        $region67: #{tpu_custom_call.1} parent=63 // pred_region
          %s1156 = sand.u32 %s226, 1
          %s1157 = scalar_lea.sflag [#allocation3], %s1156
          %s1158 = sand.u32 %s226, 1
          %s1159 = smul.addr %s1158, 32
          %s1160 = scalar_lea.vmem [#allocation2], %s1159
          %1161 = dma.done %s1157, 512
        $region68: #{tpu_custom_call.1} parent=63 // pred_fallthru
          _
      $region64: #{tpu_custom_call.1} parent=5 // pred_fallthru
        _
    $region6: #{tpu_custom_call.1} parent=1 // loop_footer
      %s22 = sadd.s32 1, %s18
    $region7: #{tpu_custom_call.1} parent=1 // loop_footer_branch
      %17 = sbr.rel target = $region3
    $region8: #{tpu_custom_call.1} parent=1 // loop_exit
      _
    %1162 = vsyncpa [#allocation3], 1
    %s1163 = scalar_lea.sflag [#allocation3], 1
    %1164 = vsyncpa %s1163, 1

// kernel: tpu_custom_call.1
$region0: #{tpu_custom_call.1}
  #allocation0 [shape = 'u32[]', space=smem, size = 0x4, offset = 0x4, fixed_abs, tag = 'smem constant byte address 0x4 - core index']
  #allocation1 [shape = 'u32[144,128]{1,0:T(1,128)}', space=vmem, size = 0x12000, scoped, tag = 'internal scratch']
  %s0 = inlined_call_operand.vmem [shape: f32[2,8,256], index: 0, kind: input, shape index: {}]
  %s1 = inlined_call_operand.vmem [shape: f32[32,8], index: 1, kind: input, shape index: {}]
  %s2 = inlined_call_operand.vmem [shape: f32[16,144], index: 2, kind: input, shape index: {}]
  %s3 = inlined_call_operand.vmem [shape: f32[9,1,256], index: 3, kind: input, shape index: {}]
  %s4 = inlined_call_operand.vmem [shape: f32[16,4], index: 4, kind: input, shape index: {}]
  %s5 = inlined_call_operand.vmem [shape: f32[2,16], index: 5, kind: input, shape index: {}]
  %s6 = inlined_call_operand.vmem [shape: f32[2,1], index: 6, kind: input, shape index: {}]
  %s7 = inlined_call_operand.vmem [shape: f32[16,2], index: 7, kind: input, shape index: {}]
  %s8 = inlined_call_operand.vmem [shape: f32[16,16], index: 8, kind: input, shape index: {}]
  %s9 = inlined_call_operand.hbm [shape: f32[2,16,256], index: 9, kind: output, shape index: {}]
  %s10 = sld [smem:[#allocation0]]
  $region69: #{tpu_custom_call.1} parent=0
    _
  %s12 = ssub.s32 1, %s10
  %s13 = scalar_select 0, %s12, %s10
  $region1: #{tpu_custom_call.1} parent=0
    #allocation2 [shape = 'u8[32768]{0}', space=vmem, size = 0x8000, scoped, tag = 'output window, operand 0']
    #allocation3 [shape = 's32[2]{0}', space=sflag, size = 0x8, scoped, tag = 'scoped memory for tpu_custom_call.1']
    %14 = vsyncpa [#allocation3], 0
    %s15 = scalar_lea.sflag [#allocation3], 1
    %16 = vsyncpa %s15, 0
    loop: start=0, step=1, limit=4
    $region2: #{tpu_custom_call.1} parent=1 // loop_pre_header
      _
    $region3: #{tpu_custom_call.1} parent=1 // loop_header
      %s18 = sphi 0, %s22
      %p19 = scmp.ge.s32.totalorder %s18, 4
      %s28 = sphi 0, %s30
      %s31 = sphi 0, %s28
      %s32 = sphi 0, %s31
      %s48 = sphi 0, %s32
      %s52 = sphi 0, %s52
      %s54 = sphi 0, %s52
      %s55 = sphi 0, %s54
      %s69 = sphi 0, %s55
      %s73 = sphi 0, %s73
      %s75 = sphi 0, %s73
      %s76 = sphi 0, %s75
      %s90 = sphi 0, %s76
      %s94 = sphi 0, %s94
      %s96 = sphi 0, %s94
      %s97 = sphi 0, %s96
      %s111 = sphi 0, %s97
      %s115 = sphi 0, %s115
      %s117 = sphi 0, %s115
      %s118 = sphi 0, %s117
      %s132 = sphi 0, %s118
      %s136 = sphi 0, %s136
      %s138 = sphi 0, %s136
      %s139 = sphi 0, %s138
      %s153 = sphi 0, %s139
      %s157 = sphi 0, %s157
      %s159 = sphi 0, %s157
      %s160 = sphi 0, %s159
      %s174 = sphi 0, %s160
      %s178 = sphi 0, %s178
      %s180 = sphi 0, %s178
      %s181 = sphi 0, %s180
      %s195 = sphi 0, %s181
      %s199 = sphi 0, %s199
      %s201 = sphi 0, %s199
      %s202 = sphi 0, %s201
      %s216 = sphi 0, %s202
      %s222 = sphi 0, %s224
      %s225 = sphi 0, %s222
      %s226 = sphi 0, %s225
      %s242 = sphi 0, %s226
    $region4: #{tpu_custom_call.1} parent=1 // loop_header_branch
      %21 = sbr.rel (%p19) target = $region8
    $region5: #{tpu_custom_call.1} parent=1 // loop_body
      %s23 = ssub.s32 %s18, 1
      %s24 = ssub.s32 %s18, 2
      %s25 = sadd.s32 %s18, 1
      %s26 = ssub.s32 %s18, %s25
      %p27 = scmp.eq.s32.totalorder %s26, 0
      %s29 = sadd.s32 %s28, 1
      %s30 = scalar_select %p27, %s28, %s29
      %p33 = pneg %p27
      %p34 = scmp.eq.s32.totalorder %s18, 1
      %p35 = por %p33, %p34
      %p36 = scmp.ne.s32.totalorder %s28, %s31
      %p37 = scmp.eq.s32.totalorder %s18, 0
      %p38 = por %p36, %p37
      %p39 = scmp.ne.s32.totalorder %s28, %s31
      %p40 = scmp.eq.s32.totalorder %s23, 1
      %p41 = por %p39, %p40
      %p42 = scmp.ne.s32.totalorder %s31, %s32
      %p43 = scmp.eq.s32.totalorder %s23, 0
      %p44 = por %p42, %p43
      %p45 = scmp.ne.s32.totalorder %s31, %s32
      %p46 = scmp.eq.s32.totalorder %s24, 1
      %p47 = por %p45, %p46
      %p49 = scmp.ne.s32.totalorder %s32, %s48
      %p50 = scmp.eq.s32.totalorder %s24, 0
      %p51 = por %p49, %p50
      %s53 = sadd.s32 %s52, 1
      %p56 = scmp.eq.s32.totalorder %s18, 1
      %p57 = scmp.ne.s32.totalorder %s52, %s54
      %p58 = scmp.eq.s32.totalorder %s18, 0
      %p59 = por %p57, %p58
      %p60 = scmp.ne.s32.totalorder %s52, %s54
      %p61 = scmp.eq.s32.totalorder %s23, 1
      %p62 = por %p60, %p61
      %p63 = scmp.ne.s32.totalorder %s54, %s55
      %p64 = scmp.eq.s32.totalorder %s23, 0
      %p65 = por %p63, %p64
      %p66 = scmp.ne.s32.totalorder %s54, %s55
      %p67 = scmp.eq.s32.totalorder %s24, 1
      %p68 = por %p66, %p67
      %p70 = scmp.ne.s32.totalorder %s55, %s69
      %p71 = scmp.eq.s32.totalorder %s24, 0
      %p72 = por %p70, %p71
      %s74 = sadd.s32 %s73, 1
      %p77 = scmp.eq.s32.totalorder %s18, 1
      %p78 = scmp.ne.s32.totalorder %s73, %s75
      %p79 = scmp.eq.s32.totalorder %s18, 0
      %p80 = por %p78, %p79
      %p81 = scmp.ne.s32.totalorder %s73, %s75
      %p82 = scmp.eq.s32.totalorder %s23, 1
      %p83 = por %p81, %p82
      %p84 = scmp.ne.s32.totalorder %s75, %s76
      %p85 = scmp.eq.s32.totalorder %s23, 0
      %p86 = por %p84, %p85
      %p87 = scmp.ne.s32.totalorder %s75, %s76
      %p88 = scmp.eq.s32.totalorder %s24, 1
      %p89 = por %p87, %p88
      %p91 = scmp.ne.s32.totalorder %s76, %s90
      %p92 = scmp.eq.s32.totalorder %s24, 0
      %p93 = por %p91, %p92
      %s95 = sadd.s32 %s94, 1
      %p98 = scmp.eq.s32.totalorder %s18, 1
      %p99 = scmp.ne.s32.totalorder %s94, %s96
      %p100 = scmp.eq.s32.totalorder %s18, 0
      %p101 = por %p99, %p100
      %p102 = scmp.ne.s32.totalorder %s94, %s96
      %p103 = scmp.eq.s32.totalorder %s23, 1
      %p104 = por %p102, %p103
      %p105 = scmp.ne.s32.totalorder %s96, %s97
      %p106 = scmp.eq.s32.totalorder %s23, 0
      %p107 = por %p105, %p106
      %p108 = scmp.ne.s32.totalorder %s96, %s97
      %p109 = scmp.eq.s32.totalorder %s24, 1
      %p110 = por %p108, %p109
      %p112 = scmp.ne.s32.totalorder %s97, %s111
      %p113 = scmp.eq.s32.totalorder %s24, 0
      %p114 = por %p112, %p113
      %s116 = sadd.s32 %s115, 1
      %p119 = scmp.eq.s32.totalorder %s18, 1
      %p120 = scmp.ne.s32.totalorder %s115, %s117
      %p121 = scmp.eq.s32.totalorder %s18, 0
      %p122 = por %p120, %p121
      %p123 = scmp.ne.s32.totalorder %s115, %s117
      %p124 = scmp.eq.s32.totalorder %s23, 1
      %p125 = por %p123, %p124
      %p126 = scmp.ne.s32.totalorder %s117, %s118
      %p127 = scmp.eq.s32.totalorder %s23, 0
      %p128 = por %p126, %p127
      %p129 = scmp.ne.s32.totalorder %s117, %s118
      %p130 = scmp.eq.s32.totalorder %s24, 1
      %p131 = por %p129, %p130
      %p133 = scmp.ne.s32.totalorder %s118, %s132
      %p134 = scmp.eq.s32.totalorder %s24, 0
      %p135 = por %p133, %p134
      %s137 = sadd.s32 %s136, 1
      %p140 = scmp.eq.s32.totalorder %s18, 1
      %p141 = scmp.ne.s32.totalorder %s136, %s138
      %p142 = scmp.eq.s32.totalorder %s18, 0
      %p143 = por %p141, %p142
      %p144 = scmp.ne.s32.totalorder %s136, %s138
      %p145 = scmp.eq.s32.totalorder %s23, 1
      %p146 = por %p144, %p145
      %p147 = scmp.ne.s32.totalorder %s138, %s139
      %p148 = scmp.eq.s32.totalorder %s23, 0
      %p149 = por %p147, %p148
      %p150 = scmp.ne.s32.totalorder %s138, %s139
      %p151 = scmp.eq.s32.totalorder %s24, 1
      %p152 = por %p150, %p151
      %p154 = scmp.ne.s32.totalorder %s139, %s153
      %p155 = scmp.eq.s32.totalorder %s24, 0
      %p156 = por %p154, %p155
      %s158 = sadd.s32 %s157, 1
      %p161 = scmp.eq.s32.totalorder %s18, 1
      %p162 = scmp.ne.s32.totalorder %s157, %s159
      %p163 = scmp.eq.s32.totalorder %s18, 0
      %p164 = por %p162, %p163
      %p165 = scmp.ne.s32.totalorder %s157, %s159
      %p166 = scmp.eq.s32.totalorder %s23, 1
      %p167 = por %p165, %p166
      %p168 = scmp.ne.s32.totalorder %s159, %s160
      %p169 = scmp.eq.s32.totalorder %s23, 0
      %p170 = por %p168, %p169
      %p171 = scmp.ne.s32.totalorder %s159, %s160
      %p172 = scmp.eq.s32.totalorder %s24, 1
      %p173 = por %p171, %p172
      %p175 = scmp.ne.s32.totalorder %s160, %s174
      %p176 = scmp.eq.s32.totalorder %s24, 0
      %p177 = por %p175, %p176
      %s179 = sadd.s32 %s178, 1
      %p182 = scmp.eq.s32.totalorder %s18, 1
      %p183 = scmp.ne.s32.totalorder %s178, %s180
      %p184 = scmp.eq.s32.totalorder %s18, 0
      %p185 = por %p183, %p184
      %p186 = scmp.ne.s32.totalorder %s178, %s180
      %p187 = scmp.eq.s32.totalorder %s23, 1
      %p188 = por %p186, %p187
      %p189 = scmp.ne.s32.totalorder %s180, %s181
      %p190 = scmp.eq.s32.totalorder %s23, 0
      %p191 = por %p189, %p190
      %p192 = scmp.ne.s32.totalorder %s180, %s181
      %p193 = scmp.eq.s32.totalorder %s24, 1
      %p194 = por %p192, %p193
      %p196 = scmp.ne.s32.totalorder %s181, %s195
      %p197 = scmp.eq.s32.totalorder %s24, 0
      %p198 = por %p196, %p197
      %s200 = sadd.s32 %s199, 1
      %p203 = scmp.eq.s32.totalorder %s18, 1
      %p204 = scmp.ne.s32.totalorder %s199, %s201
      %p205 = scmp.eq.s32.totalorder %s18, 0
      %p206 = por %p204, %p205
      %p207 = scmp.ne.s32.totalorder %s199, %s201
      %p208 = scmp.eq.s32.totalorder %s23, 1
      %p209 = por %p207, %p208
      %p210 = scmp.ne.s32.totalorder %s201, %s202
      %p211 = scmp.eq.s32.totalorder %s23, 0
      %p212 = por %p210, %p211
      %p213 = scmp.ne.s32.totalorder %s201, %s202
      %p214 = scmp.eq.s32.totalorder %s24, 1
      %p215 = por %p213, %p214
      %p217 = scmp.ne.s32.totalorder %s202, %s216
      %p218 = scmp.eq.s32.totalorder %s24, 0
      %p219 = por %p217, %p218
      %s220 = ssub.s32 %s18, %s25
      %p221 = scmp.eq.s32.totalorder %s220, 0
      %s223 = sadd.s32 %s222, 1
      %s224 = scalar_select %p221, %s222, %s223
      %p227 = pneg %p221
      %p228 = scmp.eq.s32.totalorder %s18, 1
      %p229 = por %p227, %p228
      %p230 = scmp.ne.s32.totalorder %s222, %s225
      %p231 = scmp.eq.s32.totalorder %s18, 0
      %p232 = por %p230, %p231
      %p233 = scmp.ne.s32.totalorder %s222, %s225
      %p234 = scmp.eq.s32.totalorder %s23, 1
      %p235 = por %p233, %p234
      %p236 = scmp.ne.s32.totalorder %s225, %s226
      %p237 = scmp.eq.s32.totalorder %s23, 0
      %p238 = por %p236, %p237
      %p239 = scmp.ne.s32.totalorder %s225, %s226
      %p240 = scmp.eq.s32.totalorder %s24, 1
      %p241 = por %p239, %p240
      %p243 = scmp.ne.s32.totalorder %s226, %s242
      %p244 = scmp.eq.s32.totalorder %s24, 0
      %p245 = por %p243, %p244
      %p246 = scmp.le.s32.totalorder 1, %s18
      %p247 = scmp.lt.s32.totalorder %s18, 3
      %p248 = pnand %p246, %p247
      %p249 = pneg %p248
      // Predicated region
      $region9: #{tpu_custom_call.1} parent=5 // pred_check
        _
      $region10: #{tpu_custom_call.1} parent=5 // pred_check_branch
        %251 = sbr.rel (%p248) target = $region12
      $region11: #{tpu_custom_call.1} parent=5 // pred_region
        %s252 = ssub.s32 %s18, 1
        // Predicated region
        $region13: #{tpu_custom_call.1} parent=11 // pred_check
          %p253 = pneg %p65
        $region14: #{tpu_custom_call.1} parent=11 // pred_check_branch
          %255 = sbr.rel (%p253) target = $region16
        $region15: #{tpu_custom_call.1} parent=11 // pred_region
          _
        $region16: #{tpu_custom_call.1} parent=11 // pred_fallthru
          _
        // Predicated region
        $region17: #{tpu_custom_call.1} parent=11 // pred_check
          %p256 = pneg %p86
        $region18: #{tpu_custom_call.1} parent=11 // pred_check_branch
          %258 = sbr.rel (%p256) target = $region20
        $region19: #{tpu_custom_call.1} parent=11 // pred_region
          _
        $region20: #{tpu_custom_call.1} parent=11 // pred_fallthru
          _
        // Predicated region
        $region21: #{tpu_custom_call.1} parent=11 // pred_check
          %p259 = pneg %p107
        $region22: #{tpu_custom_call.1} parent=11 // pred_check_branch
          %261 = sbr.rel (%p259) target = $region24
        $region23: #{tpu_custom_call.1} parent=11 // pred_region
          _
        $region24: #{tpu_custom_call.1} parent=11 // pred_fallthru
          _
        // Predicated region
        $region25: #{tpu_custom_call.1} parent=11 // pred_check
          %p262 = pneg %p128
        $region26: #{tpu_custom_call.1} parent=11 // pred_check_branch
          %264 = sbr.rel (%p262) target = $region28
        $region27: #{tpu_custom_call.1} parent=11 // pred_region
          _
        $region28: #{tpu_custom_call.1} parent=11 // pred_fallthru
          _
        // Predicated region
        $region29: #{tpu_custom_call.1} parent=11 // pred_check
          %p265 = pneg %p149
        $region30: #{tpu_custom_call.1} parent=11 // pred_check_branch
          %267 = sbr.rel (%p265) target = $region32
        $region31: #{tpu_custom_call.1} parent=11 // pred_region
          _
        $region32: #{tpu_custom_call.1} parent=11 // pred_fallthru
          _
        // Predicated region
        $region33: #{tpu_custom_call.1} parent=11 // pred_check
          %p268 = pneg %p170
        $region34: #{tpu_custom_call.1} parent=11 // pred_check_branch
          %270 = sbr.rel (%p268) target = $region36
        $region35: #{tpu_custom_call.1} parent=11 // pred_region
          _
        $region36: #{tpu_custom_call.1} parent=11 // pred_fallthru
          _
        // Predicated region
        $region37: #{tpu_custom_call.1} parent=11 // pred_check
          %p271 = pneg %p191
        $region38: #{tpu_custom_call.1} parent=11 // pred_check_branch
          %273 = sbr.rel (%p271) target = $region40
        $region39: #{tpu_custom_call.1} parent=11 // pred_region
          _
        $region40: #{tpu_custom_call.1} parent=11 // pred_fallthru
          _
        // Predicated region
        $region41: #{tpu_custom_call.1} parent=11 // pred_check
          %p274 = pneg %p212
        $region42: #{tpu_custom_call.1} parent=11 // pred_check_branch
          %276 = sbr.rel (%p274) target = $region44
        $region43: #{tpu_custom_call.1} parent=11 // pred_region
          _
        $region44: #{tpu_custom_call.1} parent=11 // pred_fallthru
          _
      $region12: #{tpu_custom_call.1} parent=5 // pred_fallthru
        _
      %p277 = scmp.lt.s32.totalorder %s18, 2
      // Predicated region
      $region45: #{tpu_custom_call.1} parent=5 // pred_check
        %p278 = pneg %p277
      $region46: #{tpu_custom_call.1} parent=5 // pred_check_branch
        %280 = sbr.rel (%p278) target = $region48
      $region47: #{tpu_custom_call.1} parent=5 // pred_region
        // Predicated region
        $region49: #{tpu_custom_call.1} parent=47 // pred_check
          %p281 = pneg %p38
        $region50: #{tpu_custom_call.1} parent=47 // pred_check_branch
          %283 = sbr.rel (%p281) target = $region52
        $region51: #{tpu_custom_call.1} parent=47 // pred_region
          %p284 = scmp.lt.s32.totalorder %s18, 1
          %s285 = scalar_select %p284, %s18, 1
          %s286 = smul.addr %s285, 2
          %s287 = smul.addr %s286, 8
          %s288 = scalar_lea.vmem %s0, %s287
        $region52: #{tpu_custom_call.1} parent=47 // pred_fallthru
          _
      $region48: #{tpu_custom_call.1} parent=5 // pred_fallthru
        _
      %p289 = scmp.le.s32.totalorder 1, %s18
      %p290 = scmp.lt.s32.totalorder %s18, 3
      %p291 = pnand %p289, %p290
      %p292 = pneg %p291
      // Predicated region
      $region53: #{tpu_custom_call.1} parent=5 // pred_check
        _
      $region54: #{tpu_custom_call.1} parent=5 // pred_check_branch
        %294 = sbr.rel (%p291) target = $region56
      $region55: #{tpu_custom_call.1} parent=5 // pred_region
        %s295 = ssub.s32 %s18, 1
        %p296 = scmp.lt.s32.totalorder %s23, 1
        %s297 = scalar_select %p296, %s23, 1
        %s298 = smul.addr %s297, 2
        %s299 = smul.addr %s298, 8
        %s300 = scalar_lea.vmem %s0, %s299
        %p301 = pneg %p44
        %p302 = pneg %p41
        %p303 = pneg %p65
        %p304 = pneg %p62
        %p305 = pneg %p86
        %p306 = pneg %p83
        %p307 = pneg %p107
        %p308 = pneg %p104
        %p309 = pneg %p128
        %p310 = pneg %p125
        %p311 = pneg %p149
        %p312 = pneg %p146
        %p313 = pneg %p170
        %p314 = pneg %p167
        %p315 = pneg %p191
        %p316 = pneg %p188
        %p317 = pneg %p212
        %p318 = pneg %p209
        %p319 = pneg %p238
        %p320 = pneg %p235
        %s321 = sand.u32 %s225, 1
        %s322 = scalar_lea.sflag [#allocation3], %s321
        %s323 = sand.u32 %s225, 1
        %s324 = smul.addr %s323, 32
        %s325 = scalar_lea.vmem [#allocation2], %s324
        %p326 = scmp.lt.s32.totalorder %s23, 1
        %s327 = scalar_select %p326, %s23, 1
        %s328 = smul.addr %s327, 2
        %s329 = smul.addr %s328, 8
        %s330 = scalar_lea.vmem %s0, %s329
        %v331 = vld [vmem:[%s330] sm:$0xff]
        %v332 = vld [vmem:[%s330 + $0x8] sm:$0xff]
        %v333 = vld [vmem:[%s4] sm:$0xff]
        %v334 = vld [vmem:[%s4 + $0x8] sm:$0xff]
        %v335 = vld [vmem:[%s1] sm:$0xff]
        %v336 = vld [vmem:[%s1 + $0x8] sm:$0xff]
        %v337 = vld [vmem:[%s1 + $0x10] sm:$0xff]
        %v338 = vld [vmem:[%s1 + $0x18] sm:$0xff]
        %vm339 = vcmask 64512
        %v341 = vsel %vm339, %v335, 0
        %v344 = vsel %vm339, %v336, 0
        %v347 = vsel %vm339, %v337, 0
        %v350 = vsel %vm339, %v338, 0
        %352 = vmatprep.subr.mxu0 %v332
        %353 = vmatpush1.msra.mxu0 %v331
        %354 = vmatprep.subr.mxu0 0.0
        %355 = vmatpush1.msra.mxu0 0.0
        %356 = vmatprep.subr.mxu0 0.0
        %357 = vmatpush1.msra.mxu0 0.0
        %358 = vmatprep.subr.mxu0 0.0
        %359 = vmatpush1.msra.mxu0 0.0
        %360 = vmatprep.subr.mxu0 0.0
        %361 = vmatpush1.msra.mxu0 0.0
        %362 = vmatprep.subr.mxu0 0.0
        %363 = vmatpush1.msra.mxu0 0.0
        %364 = vmatprep.subr.mxu0 0.0
        %365 = vmatpush1.msra.mxu0 0.0
        %366 = vmatprep.subr.mxu0 0.0
        %367 = vmatpush1.msra.mxu0 0.0
        %368 = vmatprep.subr.mxu0 0.0
        %369 = vmatpush1.msra.mxu0 0.0
        %370 = vmatprep.subr.mxu0 0.0
        %371 = vmatpush1.msra.mxu0 0.0
        %372 = vmatprep.subr.mxu0 0.0
        %373 = vmatpush1.msra.mxu0 0.0
        %374 = vmatprep.subr.mxu0 0.0
        %375 = vmatpush1.msra.mxu0 0.0
        %376 = vmatprep.subr.mxu0 0.0
        %377 = vmatpush1.msra.mxu0 0.0
        %378 = vmatprep.subr.mxu0 0.0
        %379 = vmatpush1.msra.mxu0 0.0
        %380 = vmatprep.subr.mxu0 0.0
        %381 = vmatpush1.msra.mxu0 0.0
        %382 = vmatprep.subr.mxu0 0.0
        %383 = vmatpush1.msra.mxu0 0.0
        %384 = vmatprep.subr.mxu0 0.0
        %385 = vmatpush1.msra.mxu0 0.0
        %386 = vmatprep.subr.mxu0 0.0
        %387 = vmatpush1.msra.mxu0 0.0
        %388 = vmatprep.subr.mxu0 0.0
        %389 = vmatpush1.msra.mxu0 0.0
        %390 = vmatprep.subr.mxu0 0.0
        %391 = vmatpush1.msra.mxu0 0.0
        %392 = vmatprep.subr.mxu0 0.0
        %393 = vmatpush1.msra.mxu0 0.0
        %394 = vmatprep.subr.mxu0 0.0
        %395 = vmatpush1.msra.mxu0 0.0
        %396 = vmatprep.subr.mxu0 0.0
        %397 = vmatpush1.msra.mxu0 0.0
        %398 = vmatprep.subr.mxu0 0.0
        %399 = vmatpush1.msra.mxu0 0.0
        %400 = vmatprep.subr.mxu0 0.0
        %401 = vmatpush1.msra.mxu0 0.0
        %402 = vmatprep.subr.mxu0 0.0
        %403 = vmatpush1.msra.mxu0 0.0
        %404 = vmatprep.subr.mxu0 0.0
        %405 = vmatpush1.msra.mxu0 0.0
        %406 = vmatprep.subr.mxu0 0.0
        %407 = vmatpush1.msra.mxu0 0.0
        %408 = vmatprep.subr.mxu0 0.0
        %409 = vmatpush1.msra.mxu0 0.0
        %410 = vmatprep.subr.mxu0 0.0
        %411 = vmatpush1.msra.mxu0 0.0
        %412 = vmatprep.subr.mxu0 0.0
        %413 = vmatpush1.msra.mxu0 0.0
        %414 = vmatprep.subr.mxu0 0.0
        %415 = vmatpush1.msra.mxu0 0.0
        %416 = vmatprep.mubr.f32.mxu0 0.0
        %417 = vmatmul.mubr.f32.gmra.mrb[0].mxu0 %v341
        %v418 = vpop.f32.mrb[0].mxu0
        %v419 = vadd.f32 0.0, %v418
        %v420 = vpop.f32.mrb[0].mxu0
        %v421 = vadd.f32 0.0, %v420
        %422 = vmatprep.mubr.f32.mxu0 0.0
        %423 = vmatmul.mubr.f32.gmra.mrb[0].mxu0 %v344
        %v424 = vpop.f32.mrb[0].mxu0
        %v425 = vadd.f32 0.0, %v424
        %v426 = vpop.f32.mrb[0].mxu0
        %v427 = vadd.f32 0.0, %v426
        %428 = vmatprep.mubr.f32.mxu0 0.0
        %429 = vmatmul.mubr.f32.gmra.mrb[0].mxu0 %v347
        %v430 = vpop.f32.mrb[0].mxu0
        %v431 = vadd.f32 0.0, %v430
        %v432 = vpop.f32.mrb[0].mxu0
        %v433 = vadd.f32 0.0, %v432
        %434 = vmatprep.mubr.f32.mxu0 0.0
        %435 = vmatmul.mubr.f32.gmra.mrb[0].mxu0 %v350
        %v436 = vpop.f32.mrb[0].mxu0
        %v437 = vadd.f32 0.0, %v436
        %v438 = vpop.f32.mrb[0].mxu0
        %v439 = vadd.f32 0.0, %v438
        %440 = vdwg.mxu0
        %442 = vset.pattern.permute.xlu0 0
        %443 = vperm.xlu0 %442, %v333
        %v444 = vpop.permute.xlu0 %443
        %447 = vset.pattern.permute.xlu0 0
        %448 = vperm.xlu0 %447, %v334
        %v449 = vpop.permute.xlu0 %448
        %v451 = vadd.f32 %v419, %v444
        %v452 = vadd.f32 %v421, %v444
        %v453 = vadd.f32 %v425, %v449
        %v454 = vadd.f32 %v427, %v449
        %v455 = vmax.f32 %v451, 0.0
        %v456 = vmax.f32 %v452, 0.0
        %v457 = vmax.f32 %v453, 0.0
        %v458 = vmax.f32 %v454, 0.0
        %459 = vrot.lane.b32.xlu0 %v455, 9
        %v460 = vpop.permute.xlu0 %459
        %461 = vrot.lane.b32.xlu0 %v457, 9
        %v462 = vpop.permute.xlu0 %461
        %463 = vrot.lane.b32.xlu0 %v456, 9
        %v464 = vpop.permute.xlu0 %463
        %465 = vrot.lane.b32.xlu0 %v458, 9
        %v466 = vpop.permute.xlu0 %465
        %v467 = vlaneseq
        %v468 = vand.u32 %v467, 127
        %vm469 = vcmp.lt.s32.totalorder %v468, 9
        %v470 = vsel %vm469, %v460, %v464
        %v471 = vsel %vm469, %v462, %v466
        %v472 = vsel %vm469, %v464, %v460
        %v473 = vsel %vm469, %v466, %v462
        %v474 = vld [vmem:[%s3] sm:$0x3]
        %v476 = vlaneseq
        %v477 = vshrl.u32 %v476, 7
        %v478 = vsub.s32 0, %v477
        %v479 = vrot.slane %v474, %v478
        %v480 = vlaneseq
        %v481 = vshrl.u32 %v480, 7
        %v482 = vsub.s32 1, %v481
        %v483 = vrot.slane %v474, %v482
        %v486 = vmul.f32 %v472, %v479
        %v487 = vmul.f32 %v470, %v483
        %v488 = vmul.f32 %v473, %v479
        %v489 = vmul.f32 %v471, %v483
        %490 = vrot.lane.b32.xlu0 %v455, 8
        %v491 = vpop.permute.xlu0 %490
        %492 = vrot.lane.b32.xlu0 %v457, 8
        %v493 = vpop.permute.xlu0 %492
        %494 = vrot.lane.b32.xlu0 %v456, 8
        %v495 = vpop.permute.xlu0 %494
        %496 = vrot.lane.b32.xlu0 %v458, 8
        %v497 = vpop.permute.xlu0 %496
        %vm498 = vcmp.lt.s32.totalorder %v468, 8
        %v499 = vsel %vm498, %v491, %v495
        %v500 = vsel %vm498, %v493, %v497
        %v501 = vsel %vm498, %v495, %v491
        %v502 = vsel %vm498, %v497, %v493
        %s503 = scalar_lea.vmem %s3, 2
        %v504 = vld [vmem:[%s503] sm:$0x3]
        %v506 = vlaneseq
        %v507 = vshrl.u32 %v506, 7
        %v508 = vsub.s32 0, %v507
        %v509 = vrot.slane %v504, %v508
        %v510 = vlaneseq
        %v511 = vshrl.u32 %v510, 7
        %v512 = vsub.s32 1, %v511
        %v513 = vrot.slane %v504, %v512
        %v516 = vmul.f32 %v501, %v509
        %v517 = vmul.f32 %v499, %v513
        %v518 = vmul.f32 %v502, %v509
        %v519 = vmul.f32 %v500, %v513
        %520 = vrot.lane.b32.xlu0 %v455, 7
        %v521 = vpop.permute.xlu0 %520
        %522 = vrot.lane.b32.xlu0 %v457, 7
        %v523 = vpop.permute.xlu0 %522
        %524 = vrot.lane.b32.xlu0 %v456, 7
        %v525 = vpop.permute.xlu0 %524
        %526 = vrot.lane.b32.xlu0 %v458, 7
        %v527 = vpop.permute.xlu0 %526
        %vm528 = vcmp.lt.s32.totalorder %v468, 7
        %v529 = vsel %vm528, %v521, %v525
        %v530 = vsel %vm528, %v523, %v527
        %v531 = vsel %vm528, %v525, %v521
        %v532 = vsel %vm528, %v527, %v523
        %s533 = scalar_lea.vmem %s3, 4
        %v534 = vld [vmem:[%s533] sm:$0x3]
        %v536 = vlaneseq
        %v537 = vshrl.u32 %v536, 7
        %v538 = vsub.s32 0, %v537
        %v539 = vrot.slane %v534, %v538
        %v540 = vlaneseq
        %v541 = vshrl.u32 %v540, 7
        %v542 = vsub.s32 1, %v541
        %v543 = vrot.slane %v534, %v542
        %v546 = vmul.f32 %v531, %v539
        %v547 = vmul.f32 %v529, %v543
        %v548 = vmul.f32 %v532, %v539
        %v549 = vmul.f32 %v530, %v543
        %550 = vrot.lane.b32.xlu0 %v455, 1
        %v551 = vpop.permute.xlu0 %550
        %552 = vrot.lane.b32.xlu0 %v457, 1
        %v553 = vpop.permute.xlu0 %552
        %554 = vrot.lane.b32.xlu0 %v456, 1
        %v555 = vpop.permute.xlu0 %554
        %556 = vrot.lane.b32.xlu0 %v458, 1
        %v557 = vpop.permute.xlu0 %556
        %vm558 = vcmp.lt.s32.totalorder %v468, 1
        %v559 = vsel %vm558, %v551, %v555
        %v560 = vsel %vm558, %v553, %v557
        %v561 = vsel %vm558, %v555, %v551
        %v562 = vsel %vm558, %v557, %v553
        %s563 = scalar_lea.vmem %s3, 6
        %v564 = vld [vmem:[%s563] sm:$0x3]
        %v566 = vlaneseq
        %v567 = vshrl.u32 %v566, 7
        %v568 = vsub.s32 0, %v567
        %v569 = vrot.slane %v564, %v568
        %v570 = vlaneseq
        %v571 = vshrl.u32 %v570, 7
        %v572 = vsub.s32 1, %v571
        %v573 = vrot.slane %v564, %v572
        %v576 = vmul.f32 %v561, %v569
        %v577 = vmul.f32 %v559, %v573
        %v578 = vmul.f32 %v562, %v569
        %v579 = vmul.f32 %v560, %v573
        %580 = vrot.lane.b32.xlu0 %v455, 127
        %v581 = vpop.permute.xlu0 %580
        %582 = vrot.lane.b32.xlu0 %v457, 127
        %v583 = vpop.permute.xlu0 %582
        %584 = vrot.lane.b32.xlu0 %v456, 127
        %v585 = vpop.permute.xlu0 %584
        %586 = vrot.lane.b32.xlu0 %v458, 127
        %v587 = vpop.permute.xlu0 %586
        %vm588 = vcmp.lt.s32.totalorder %v468, 127
        %v589 = vsel %vm588, %v581, %v585
        %v590 = vsel %vm588, %v583, %v587
        %v591 = vsel %vm588, %v585, %v581
        %v592 = vsel %vm588, %v587, %v583
        %s593 = scalar_lea.vmem %s3, 10
        %v594 = vld [vmem:[%s593] sm:$0x3]
        %v596 = vlaneseq
        %v597 = vshrl.u32 %v596, 7
        %v598 = vsub.s32 0, %v597
        %v599 = vrot.slane %v594, %v598
        %v600 = vlaneseq
        %v601 = vshrl.u32 %v600, 7
        %v602 = vsub.s32 1, %v601
        %v603 = vrot.slane %v594, %v602
        %v606 = vmul.f32 %v589, %v599
        %v607 = vmul.f32 %v591, %v603
        %v608 = vmul.f32 %v590, %v599
        %v609 = vmul.f32 %v592, %v603
        %610 = vrot.lane.b32.xlu0 %v455, 121
        %v611 = vpop.permute.xlu0 %610
        %612 = vrot.lane.b32.xlu0 %v457, 121
        %v613 = vpop.permute.xlu0 %612
        %614 = vrot.lane.b32.xlu0 %v456, 121
        %v615 = vpop.permute.xlu0 %614
        %616 = vrot.lane.b32.xlu0 %v458, 121
        %v617 = vpop.permute.xlu0 %616
        %vm618 = vcmp.lt.s32.totalorder %v468, 121
        %v619 = vsel %vm618, %v611, %v615
        %v620 = vsel %vm618, %v613, %v617
        %v621 = vsel %vm618, %v615, %v611
        %v622 = vsel %vm618, %v617, %v613
        %s623 = scalar_lea.vmem %s3, 12
        %v624 = vld [vmem:[%s623] sm:$0x3]
        %v626 = vlaneseq
        %v627 = vshrl.u32 %v626, 7
        %v628 = vsub.s32 0, %v627
        %v629 = vrot.slane %v624, %v628
        %v630 = vlaneseq
        %v631 = vshrl.u32 %v630, 7
        %v632 = vsub.s32 1, %v631
        %v633 = vrot.slane %v624, %v632
        %v636 = vmul.f32 %v619, %v629
        %v637 = vmul.f32 %v621, %v633
        %v638 = vmul.f32 %v620, %v629
        %v639 = vmul.f32 %v622, %v633
        %640 = vrot.lane.b32.xlu0 %v455, 120
        %v641 = vpop.permute.xlu0 %640
        %642 = vrot.lane.b32.xlu0 %v457, 120
        %v643 = vpop.permute.xlu0 %642
        %644 = vrot.lane.b32.xlu0 %v456, 120
        %v645 = vpop.permute.xlu0 %644
        %646 = vrot.lane.b32.xlu0 %v458, 120
        %v647 = vpop.permute.xlu0 %646
        %vm648 = vcmp.lt.s32.totalorder %v468, 120
        %v649 = vsel %vm648, %v641, %v645
        %v650 = vsel %vm648, %v643, %v647
        %v651 = vsel %vm648, %v645, %v641
        %v652 = vsel %vm648, %v647, %v643
        %s653 = scalar_lea.vmem %s3, 14
        %v654 = vld [vmem:[%s653] sm:$0x3]
        %v656 = vlaneseq
        %v657 = vshrl.u32 %v656, 7
        %v658 = vsub.s32 0, %v657
        %v659 = vrot.slane %v654, %v658
        %v660 = vlaneseq
        %v661 = vshrl.u32 %v660, 7
        %v662 = vsub.s32 1, %v661
        %v663 = vrot.slane %v654, %v662
        %v666 = vmul.f32 %v649, %v659
        %v667 = vmul.f32 %v651, %v663
        %v668 = vmul.f32 %v650, %v659
        %v669 = vmul.f32 %v652, %v663
        %670 = vrot.lane.b32.xlu0 %v455, 119
        %v671 = vpop.permute.xlu0 %670
        %672 = vrot.lane.b32.xlu0 %v457, 119
        %v673 = vpop.permute.xlu0 %672
        %674 = vrot.lane.b32.xlu0 %v456, 119
        %v675 = vpop.permute.xlu0 %674
        %676 = vrot.lane.b32.xlu0 %v458, 119
        %v677 = vpop.permute.xlu0 %676
        %vm678 = vcmp.lt.s32.totalorder %v468, 119
        %v679 = vsel %vm678, %v671, %v675
        %v680 = vsel %vm678, %v673, %v677
        %v681 = vsel %vm678, %v675, %v671
        %v682 = vsel %vm678, %v677, %v673
        %s683 = scalar_lea.vmem %s3, 16
        %v684 = vld [vmem:[%s683] sm:$0x3]
        %v686 = vlaneseq
        %v687 = vshrl.u32 %v686, 7
        %v688 = vsub.s32 0, %v687
        %v689 = vrot.slane %v684, %v688
        %v690 = vlaneseq
        %v691 = vshrl.u32 %v690, 7
        %v692 = vsub.s32 1, %v691
        %v693 = vrot.slane %v684, %v692
        %v696 = vmul.f32 %v679, %v689
        %v697 = vmul.f32 %v681, %v693
        %v698 = vmul.f32 %v680, %v689
        %v699 = vmul.f32 %v682, %v693
        %v700 = vld [vmem:[%s2] sm:$0xff]
        %v701 = vld [vmem:[%s2 + $0x8] sm:$0xff]
        %v702 = vld [vmem:[%s2 + $0x10] sm:$0xff]
        %v703 = vld [vmem:[%s2 + $0x18] sm:$0xff]
        %704 = vset.pattern.permute.xlu0 1
        %705 = vperm.xlu0 %704, %v333
        %v706 = vpop.permute.xlu0 %705
        %708 = vset.pattern.permute.xlu0 1
        %709 = vperm.xlu0 %708, %v334
        %v710 = vpop.permute.xlu0 %709
        %vm712 = vcmask 130048
        %v714 = vsel %vm712, %v701, 0
        %v717 = vsel %vm712, %v703, 0
        %719 = vmatprep.subr.mxu0 %v487
        %720 = vmatpush1.msra.mxu0 %v486
        %721 = vmatprep.subr.mxu0 %v489
        %722 = vmatpush1.msra.mxu0 %v488
        %723 = vmatprep.subr.mxu0 %v517
        %724 = vmatpush1.msra.mxu0 %v516
        %725 = vmatprep.subr.mxu0 %v519
        %726 = vmatpush1.msra.mxu0 %v518
        %727 = vmatprep.subr.mxu0 %v547
        %728 = vmatpush1.msra.mxu0 %v546
        %729 = vmatprep.subr.mxu0 %v549
        %730 = vmatpush1.msra.mxu0 %v548
        %731 = vmatprep.subr.mxu0 %v577
        %732 = vmatpush1.msra.mxu0 %v576
        %733 = vmatprep.subr.mxu0 %v579
        %734 = vmatpush1.msra.mxu0 %v578
        %735 = vmatprep.subr.mxu0 %v456
        %736 = vmatpush1.msra.mxu0 %v455
        %737 = vmatprep.subr.mxu0 %v458
        %738 = vmatpush1.msra.mxu0 %v457
        %739 = vmatprep.subr.mxu0 %v607
        %740 = vmatpush1.msra.mxu0 %v606
        %741 = vmatprep.subr.mxu0 %v609
        %742 = vmatpush1.msra.mxu0 %v608
        %743 = vmatprep.subr.mxu0 %v637
        %744 = vmatpush1.msra.mxu0 %v636
        %745 = vmatprep.subr.mxu0 %v639
        %746 = vmatpush1.msra.mxu0 %v638
        %747 = vmatprep.subr.mxu0 %v667
        %748 = vmatpush1.msra.mxu0 %v666
        %749 = vmatprep.subr.mxu0 %v669
        %750 = vmatpush1.msra.mxu0 %v668
        %751 = vmatprep.subr.mxu0 %v697
        %752 = vmatpush1.msra.mxu0 %v696
        %753 = vmatprep.subr.mxu0 %v699
        %754 = vmatpush1.msra.mxu0 %v698
        %755 = vmatprep.subr.mxu0 0.0
        %756 = vmatpush1.msra.mxu0 0.0
        %757 = vmatprep.subr.mxu0 0.0
        %758 = vmatpush1.msra.mxu0 0.0
        %759 = vmatprep.subr.mxu0 0.0
        %760 = vmatpush1.msra.mxu0 0.0
        %761 = vmatprep.subr.mxu0 0.0
        %762 = vmatpush1.msra.mxu0 0.0
        %763 = vmatprep.subr.mxu0 0.0
        %764 = vmatpush1.msra.mxu0 0.0
        %765 = vmatprep.subr.mxu0 0.0
        %766 = vmatpush1.msra.mxu0 0.0
        %767 = vmatprep.subr.mxu0 0.0
        %768 = vmatpush1.msra.mxu0 0.0
        %769 = vmatprep.subr.mxu0 0.0
        %770 = vmatpush1.msra.mxu0 0.0
        %771 = vmatprep.subr.mxu0 0.0
        %772 = vmatpush1.msra.mxu0 0.0
        %773 = vmatprep.subr.mxu0 0.0
        %774 = vmatpush1.msra.mxu0 0.0
        %775 = vmatprep.subr.mxu0 0.0
        %776 = vmatpush1.msra.mxu0 0.0
        %777 = vmatprep.subr.mxu0 0.0
        %778 = vmatpush1.msra.mxu0 0.0
        %779 = vmatprep.subr.mxu0 0.0
        %780 = vmatpush1.msra.mxu0 0.0
        %781 = vmatprep.subr.mxu0 0.0
        %782 = vmatpush1.msra.mxu0 0.0
        %783 = vmatprep.mubr.f32.mxu0 %v714
        %784 = vmatmul.mubr.f32.gmra.mrb[0].mxu0 %v700
        %v785 = vpop.f32.mrb[0].mxu0
        %v786 = vadd.f32 %v706, %v785
        %v787 = vpop.f32.mrb[0].mxu0
        %v788 = vadd.f32 %v706, %v787
        %789 = vmatprep.mubr.f32.mxu0 %v717
        %790 = vmatmul.mubr.f32.gmra.mrb[0].mxu0 %v702
        %v791 = vpop.f32.mrb[0].mxu0
        %v792 = vadd.f32 %v710, %v791
        %v793 = vpop.f32.mrb[0].mxu0
        %v794 = vadd.f32 %v710, %v793
        %795 = vdwg.mxu0
        %v796 = vmax.f32 %v786, 0.0
        %v797 = vmax.f32 %v788, 0.0
        %v798 = vmax.f32 %v792, 0.0
        %v799 = vmax.f32 %v794, 0.0
        %800 = vadd.xlane.f32.xlu0 %v796
        %v801 = vpop.xlane.xlu0 %800
        %802 = vadd.xlane.f32.xlu0 %v798
        %v803 = vpop.xlane.xlu0 %802
        %804 = vadd.xlane.f32.xlu0 %v797
        %v805 = vpop.xlane.xlu0 %804
        %806 = vadd.xlane.f32.xlu0 %v799
        %v807 = vpop.xlane.xlu0 %806
        %vm808 = vcmask 7168
        %v809 = vsel %vm808, %v801, %v805
        %v810 = vsel %vm808, %v803, %v807
        %v811 = vld [vmem:[%s5] sm:$0x3]
        %v812 = vld [vmem:[%s6] sm:$0x3]
        %814 = vset.pattern.permute.xlu0 0
        %815 = vperm.xlu0 %814, %v812
        %v816 = vpop.permute.xlu0 %815
        %v819 = vsel %vm712, %v811, 0
        %821 = vmatprep.subr.mxu0 0.0
        %822 = vmatpush1.msra.mxu0 %v809
        %823 = vmatprep.subr.mxu0 0.0
        %824 = vmatpush1.msra.mxu0 %v810
        %825 = vmatprep.subr.mxu0 0.0
        %826 = vmatpush1.msra.mxu0 0.0
        %827 = vmatprep.subr.mxu0 0.0
        %828 = vmatpush1.msra.mxu0 0.0
        %829 = vmatprep.subr.mxu0 0.0
        %830 = vmatpush1.msra.mxu0 0.0
        %831 = vmatprep.subr.mxu0 0.0
        %832 = vmatpush1.msra.mxu0 0.0
        %833 = vmatprep.subr.mxu0 0.0
        %834 = vmatpush1.msra.mxu0 0.0
        %835 = vmatprep.subr.mxu0 0.0
        %836 = vmatpush1.msra.mxu0 0.0
        %837 = vmatprep.subr.mxu0 0.0
        %838 = vmatpush1.msra.mxu0 0.0
        %839 = vmatprep.subr.mxu0 0.0
        %840 = vmatpush1.msra.mxu0 0.0
        %841 = vmatprep.subr.mxu0 0.0
        %842 = vmatpush1.msra.mxu0 0.0
        %843 = vmatprep.subr.mxu0 0.0
        %844 = vmatpush1.msra.mxu0 0.0
        %845 = vmatprep.subr.mxu0 0.0
        %846 = vmatpush1.msra.mxu0 0.0
        %847 = vmatprep.subr.mxu0 0.0
        %848 = vmatpush1.msra.mxu0 0.0
        %849 = vmatprep.subr.mxu0 0.0
        %850 = vmatpush1.msra.mxu0 0.0
        %851 = vmatprep.subr.mxu0 0.0
        %852 = vmatpush1.msra.mxu0 0.0
        %853 = vmatprep.subr.mxu0 0.0
        %854 = vmatpush1.msra.mxu0 0.0
        %855 = vmatprep.subr.mxu0 0.0
        %856 = vmatpush1.msra.mxu0 0.0
        %857 = vmatprep.subr.mxu0 0.0
        %858 = vmatpush1.msra.mxu0 0.0
        %859 = vmatprep.subr.mxu0 0.0
        %860 = vmatpush1.msra.mxu0 0.0
        %861 = vmatprep.subr.mxu0 0.0
        %862 = vmatpush1.msra.mxu0 0.0
        %863 = vmatprep.subr.mxu0 0.0
        %864 = vmatpush1.msra.mxu0 0.0
        %865 = vmatprep.subr.mxu0 0.0
        %866 = vmatpush1.msra.mxu0 0.0
        %867 = vmatprep.subr.mxu0 0.0
        %868 = vmatpush1.msra.mxu0 0.0
        %869 = vmatprep.subr.mxu0 0.0
        %870 = vmatpush1.msra.mxu0 0.0
        %871 = vmatprep.subr.mxu0 0.0
        %872 = vmatpush1.msra.mxu0 0.0
        %873 = vmatprep.subr.mxu0 0.0
        %874 = vmatpush1.msra.mxu0 0.0
        %875 = vmatprep.subr.mxu0 0.0
        %876 = vmatpush1.msra.mxu0 0.0
        %877 = vmatprep.subr.mxu0 0.0
        %878 = vmatpush1.msra.mxu0 0.0
        %879 = vmatprep.subr.mxu0 0.0
        %880 = vmatpush1.msra.mxu0 0.0
        %881 = vmatprep.subr.mxu0 0.0
        %882 = vmatpush1.msra.mxu0 0.0
        %883 = vmatprep.subr.mxu0 0.0
        %884 = vmatpush1.msra.mxu0 0.0
        %885 = vmatprep.mubr.f32.mxu0 0.0
        %886 = vmatmul.mubr.f32.gmra.mrb[0].mxu0 %v819
        %v887 = vpop.f32.mrb[0].mxu0
        %v888 = vadd.f32 %v816, %v887
        %v889 = vpop.f32.mrb[0].mxu0
        %890 = vdwg.mxu0
        %v891 = vmax.f32 %v888, 0.0
        %v892 = vld [vmem:[%s7] sm:$0xff]
        %v893 = vld [vmem:[%s7 + $0x8] sm:$0xff]
        %894 = vset.pattern.permute.xlu0 3
        %895 = vperm.xlu0 %894, %v333
        %v896 = vpop.permute.xlu0 %895
        %898 = vset.pattern.permute.xlu0 3
        %899 = vperm.xlu0 %898, %v334
        %v900 = vpop.permute.xlu0 %899
        %vm902 = vcmask 15360
        %v904 = vsel %vm902, %v892, 0
        %v907 = vsel %vm902, %v893, 0
        %vm909 = vcmask 1041408
        %v911 = vsel %vm909, %v891, 0
        %913 = vmatprep.subr.mxu0 0.0
        %914 = vmatpush1.msra.mxu0 %v911
        %915 = vmatprep.subr.mxu0 0.0
        %916 = vmatpush1.msra.mxu0 0.0
        %917 = vmatprep.subr.mxu0 0.0
        %918 = vmatpush1.msra.mxu0 0.0
        %919 = vmatprep.subr.mxu0 0.0
        %920 = vmatpush1.msra.mxu0 0.0
        %921 = vmatprep.subr.mxu0 0.0
        %922 = vmatpush1.msra.mxu0 0.0
        %923 = vmatprep.subr.mxu0 0.0
        %924 = vmatpush1.msra.mxu0 0.0
        %925 = vmatprep.subr.mxu0 0.0
        %926 = vmatpush1.msra.mxu0 0.0
        %927 = vmatprep.subr.mxu0 0.0
        %928 = vmatpush1.msra.mxu0 0.0
        %929 = vmatprep.subr.mxu0 0.0
        %930 = vmatpush1.msra.mxu0 0.0
        %931 = vmatprep.subr.mxu0 0.0
        %932 = vmatpush1.msra.mxu0 0.0
        %933 = vmatprep.subr.mxu0 0.0
        %934 = vmatpush1.msra.mxu0 0.0
        %935 = vmatprep.subr.mxu0 0.0
        %936 = vmatpush1.msra.mxu0 0.0
        %937 = vmatprep.subr.mxu0 0.0
        %938 = vmatpush1.msra.mxu0 0.0
        %939 = vmatprep.subr.mxu0 0.0
        %940 = vmatpush1.msra.mxu0 0.0
        %941 = vmatprep.subr.mxu0 0.0
        %942 = vmatpush1.msra.mxu0 0.0
        %943 = vmatprep.subr.mxu0 0.0
        %944 = vmatpush1.msra.mxu0 0.0
        %945 = vmatprep.subr.mxu0 0.0
        %946 = vmatpush1.msra.mxu0 0.0
        %947 = vmatprep.subr.mxu0 0.0
        %948 = vmatpush1.msra.mxu0 0.0
        %949 = vmatprep.subr.mxu0 0.0
        %950 = vmatpush1.msra.mxu0 0.0
        %951 = vmatprep.subr.mxu0 0.0
        %952 = vmatpush1.msra.mxu0 0.0
        %953 = vmatprep.subr.mxu0 0.0
        %954 = vmatpush1.msra.mxu0 0.0
        %955 = vmatprep.subr.mxu0 0.0
        %956 = vmatpush1.msra.mxu0 0.0
        %957 = vmatprep.subr.mxu0 0.0
        %958 = vmatpush1.msra.mxu0 0.0
        %959 = vmatprep.subr.mxu0 0.0
        %960 = vmatpush1.msra.mxu0 0.0
        %961 = vmatprep.subr.mxu0 0.0
        %962 = vmatpush1.msra.mxu0 0.0
        %963 = vmatprep.subr.mxu0 0.0
        %964 = vmatpush1.msra.mxu0 0.0
        %965 = vmatprep.subr.mxu0 0.0
        %966 = vmatpush1.msra.mxu0 0.0
        %967 = vmatprep.subr.mxu0 0.0
        %968 = vmatpush1.msra.mxu0 0.0
        %969 = vmatprep.subr.mxu0 0.0
        %970 = vmatpush1.msra.mxu0 0.0
        %971 = vmatprep.subr.mxu0 0.0
        %972 = vmatpush1.msra.mxu0 0.0
        %973 = vmatprep.subr.mxu0 0.0
        %974 = vmatpush1.msra.mxu0 0.0
        %975 = vmatprep.subr.mxu0 0.0
        %976 = vmatpush1.msra.mxu0 0.0
        %977 = vmatprep.mubr.f32.mxu0 0.0
        %978 = vmatmul.mubr.f32.gmra.mrb[0].mxu0 %v904
        %v979 = vpop.f32.mrb[0].mxu0
        %v980 = vadd.f32 %v896, %v979
        %v981 = vpop.f32.mrb[0].mxu0
        %982 = vmatprep.mubr.f32.mxu0 0.0
        %983 = vmatmul.mubr.f32.gmra.mrb[0].mxu0 %v907
        %v984 = vpop.f32.mrb[0].mxu0
        %v985 = vadd.f32 %v900, %v984
        %v986 = vpop.f32.mrb[0].mxu0
        %987 = vdwg.mxu0
        %v988 = vxor.u32 %v980, 2147483648
        %v989 = vxor.u32 %v985, 2147483648
        %v990 = vmul.f32 %v988, 1.442695
        %v991 = vpow.pop %v990
        %v992 = vmul.f32 %v989, 1.442695
        %v993 = vpow.pop %v992
        %v994 = vadd.f32 %v991, 1.0
        %v995 = vadd.f32 %v993, 1.0
        %v996 = vrcp.pop %v994
        %v997 = vmul.f32 1.0, %v996
        %v998 = vrcp.pop %v995
        %v999 = vmul.f32 1.0, %v998
        %1001 = vset.pattern.permute.xlu0 0
        %1002 = vperm.xlu0 %1001, %v997
        %v1003 = vpop.permute.xlu0 %1002
        %1006 = vset.pattern.permute.xlu0 0
        %1007 = vperm.xlu0 %1006, %v999
        %v1008 = vpop.permute.xlu0 %1007
        %v1010 = vmul.f32 %v796, %v1003
        %v1011 = vmul.f32 %v798, %v1008
        %1012 = vset.pattern.permute.xlu0 1
        %1013 = vperm.xlu0 %1012, %v997
        %v1014 = vpop.permute.xlu0 %1013
        %1016 = vset.pattern.permute.xlu0 1
        %1017 = vperm.xlu0 %1016, %v999
        %v1018 = vpop.permute.xlu0 %1017
        %v1020 = vmul.f32 %v797, %v1014
        %v1021 = vmul.f32 %v799, %v1018
        %v1022 = vld [vmem:[%s8] sm:$0xff]
        %v1023 = vld [vmem:[%s8 + $0x8] sm:$0xff]
        %v1025 = vsel %vm712, %v1022, 0
        %v1028 = vsel %vm712, %v1023, 0
        %1030 = vmatprep.subr.mxu0 %v1020
        %1031 = vmatpush1.msra.mxu0 %v1010
        %1032 = vmatprep.subr.mxu0 %v1021
        %1033 = vmatpush1.msra.mxu0 %v1011
        %1034 = vmatprep.subr.mxu0 0.0
        %1035 = vmatpush1.msra.mxu0 0.0
        %1036 = vmatprep.subr.mxu0 0.0
        %1037 = vmatpush1.msra.mxu0 0.0
        %1038 = vmatprep.subr.mxu0 0.0
        %1039 = vmatpush1.msra.mxu0 0.0
        %1040 = vmatprep.subr.mxu0 0.0
        %1041 = vmatpush1.msra.mxu0 0.0
        %1042 = vmatprep.subr.mxu0 0.0
        %1043 = vmatpush1.msra.mxu0 0.0
        %1044 = vmatprep.subr.mxu0 0.0
        %1045 = vmatpush1.msra.mxu0 0.0
        %1046 = vmatprep.subr.mxu0 0.0
        %1047 = vmatpush1.msra.mxu0 0.0
        %1048 = vmatprep.subr.mxu0 0.0
        %1049 = vmatpush1.msra.mxu0 0.0
        %1050 = vmatprep.subr.mxu0 0.0
        %1051 = vmatpush1.msra.mxu0 0.0
        %1052 = vmatprep.subr.mxu0 0.0
        %1053 = vmatpush1.msra.mxu0 0.0
        %1054 = vmatprep.subr.mxu0 0.0
        %1055 = vmatpush1.msra.mxu0 0.0
        %1056 = vmatprep.subr.mxu0 0.0
        %1057 = vmatpush1.msra.mxu0 0.0
        %1058 = vmatprep.subr.mxu0 0.0
        %1059 = vmatpush1.msra.mxu0 0.0
        %1060 = vmatprep.subr.mxu0 0.0
        %1061 = vmatpush1.msra.mxu0 0.0
        %1062 = vmatprep.subr.mxu0 0.0
        %1063 = vmatpush1.msra.mxu0 0.0
        %1064 = vmatprep.subr.mxu0 0.0
        %1065 = vmatpush1.msra.mxu0 0.0
        %1066 = vmatprep.subr.mxu0 0.0
        %1067 = vmatpush1.msra.mxu0 0.0
        %1068 = vmatprep.subr.mxu0 0.0
        %1069 = vmatpush1.msra.mxu0 0.0
        %1070 = vmatprep.subr.mxu0 0.0
        %1071 = vmatpush1.msra.mxu0 0.0
        %1072 = vmatprep.subr.mxu0 0.0
        %1073 = vmatpush1.msra.mxu0 0.0
        %1074 = vmatprep.subr.mxu0 0.0
        %1075 = vmatpush1.msra.mxu0 0.0
        %1076 = vmatprep.subr.mxu0 0.0
        %1077 = vmatpush1.msra.mxu0 0.0
        %1078 = vmatprep.subr.mxu0 0.0
        %1079 = vmatpush1.msra.mxu0 0.0
        %1080 = vmatprep.subr.mxu0 0.0
        %1081 = vmatpush1.msra.mxu0 0.0
        %1082 = vmatprep.subr.mxu0 0.0
        %1083 = vmatpush1.msra.mxu0 0.0
        %1084 = vmatprep.subr.mxu0 0.0
        %1085 = vmatpush1.msra.mxu0 0.0
        %1086 = vmatprep.subr.mxu0 0.0
        %1087 = vmatpush1.msra.mxu0 0.0
        %1088 = vmatprep.subr.mxu0 0.0
        %1089 = vmatpush1.msra.mxu0 0.0
        %1090 = vmatprep.subr.mxu0 0.0
        %1091 = vmatpush1.msra.mxu0 0.0
        %1092 = vmatprep.subr.mxu0 0.0
        %1093 = vmatpush1.msra.mxu0 0.0
        %1094 = vmatprep.mubr.f32.mxu0 0.0
        %1095 = vmatmul.mubr.f32.gmra.mrb[0].mxu0 %v1025
        %v1096 = vpop.f32.mrb[0].mxu0
        %v1097 = vadd.f32 %v431, %v1096
        %v1098 = vpop.f32.mrb[0].mxu0
        %v1099 = vadd.f32 %v433, %v1098
        %1100 = vmatprep.mubr.f32.mxu0 0.0
        %1101 = vmatmul.mubr.f32.gmra.mrb[0].mxu0 %v1028
        %v1102 = vpop.f32.mrb[0].mxu0
        %v1103 = vadd.f32 %v437, %v1102
        %v1104 = vpop.f32.mrb[0].mxu0
        %v1105 = vadd.f32 %v439, %v1104
        %1106 = vdwg.mxu0
        %1107 = vset.pattern.permute.xlu0 2
        %1108 = vperm.xlu0 %1107, %v333
        %v1109 = vpop.permute.xlu0 %1108
        %1111 = vset.pattern.permute.xlu0 2
        %1112 = vperm.xlu0 %1111, %v334
        %v1113 = vpop.permute.xlu0 %1112
        %v1115 = vadd.f32 %v1097, %v1109
        %v1116 = vadd.f32 %v1099, %v1109
        %v1117 = vadd.f32 %v1103, %v1113
        %v1118 = vadd.f32 %v1105, %v1113
        %v1119 = vmax.f32 %v1115, 0.0
        %v1120 = vmax.f32 %v1116, 0.0
        %v1121 = vmax.f32 %v1117, 0.0
        %v1122 = vmax.f32 %v1118, 0.0
        %1123 = vst [vmem:[%s325] sm:$0xff] %v1119
        %1124 = vst [vmem:[%s325 + $0x8] sm:$0xff] %v1120
        %1125 = vst [vmem:[%s325 + $0x10] sm:$0xff] %v1121
        %1126 = vst [vmem:[%s325 + $0x18] sm:$0xff] %v1122
        %s1127 = sand.u32 %s225, 1
        %s1128 = scalar_lea.sflag [#allocation3], %s1127
        %s1129 = sand.u32 %s225, 1
        %s1130 = smul.addr %s1129, 32
        %s1131 = scalar_lea.vmem [#allocation2], %s1130
        // Predicated region
        $region57: #{tpu_custom_call.1} parent=55 // pred_check
          %p1132 = pneg %p235
        $region58: #{tpu_custom_call.1} parent=55 // pred_check_branch
          %1134 = sbr.rel (%p1132) target = $region60
        $region59: #{tpu_custom_call.1} parent=55 // pred_region
          %s1136 = ssub.s32 512, 512
          %1137 = vsyncadd %s1128, %s1136
          %s1138 = smul.addr %s23, 4
          %s1139 = smul.addr %s1138, 128
          %s1140 = scalar_lea.hbm %s9, %s1139
          %s1141 = sshll.u32 %s1131, 4
          %s1142 = int_to_ptr.vmem [resolvable:$true] %s1141
          %1147 = dma.vmem_to_hbm [thread:$0]  %s1142, 512, %s1140, %s1128, 256, 256, 16
        $region60: #{tpu_custom_call.1} parent=55 // pred_fallthru
          _
      $region56: #{tpu_custom_call.1} parent=5 // pred_fallthru
        _
      %p1148 = scmp.le.s32.totalorder 2, %s18
      // Predicated region
      $region61: #{tpu_custom_call.1} parent=5 // pred_check
        %p1149 = pneg %p1148
      $region62: #{tpu_custom_call.1} parent=5 // pred_check_branch
        %1151 = sbr.rel (%p1149) target = $region64
      $region63: #{tpu_custom_call.1} parent=5 // pred_region
        %s1152 = ssub.s32 %s18, 2
        // Predicated region
        $region65: #{tpu_custom_call.1} parent=63 // pred_check
          %p1153 = pneg %p241
        $region66: #{tpu_custom_call.1} parent=63 // pred_check_branch
          %1155 = sbr.rel (%p1153) target = $region68
        $region67: #{tpu_custom_call.1} parent=63 // pred_region
          %s1156 = sand.u32 %s226, 1
          %s1157 = scalar_lea.sflag [#allocation3], %s1156
          %s1158 = sand.u32 %s226, 1
          %s1159 = smul.addr %s1158, 32
          %s1160 = scalar_lea.vmem [#allocation2], %s1159
          %1161 = dma.done %s1157, 512
        $region68: #{tpu_custom_call.1} parent=63 // pred_fallthru
          _
      $region64: #{tpu_custom_call.1} parent=5 // pred_fallthru
        _
    $region6: #{tpu_custom_call.1} parent=1 // loop_footer
      %s22 = sadd.s32 1, %s18
    $region7: #{tpu_custom_call.1} parent=1 // loop_footer_branch
      %17 = sbr.rel target = $region3
    $region8: #{tpu_custom_call.1} parent=1 // loop_exit
      _
    %1162 = vsyncpa [#allocation3], 1
    %s1163 = scalar_lea.sflag [#allocation3], 1
    %1164 = vsyncpa %s1163, 1

</llo_original>
